<compile_context>
chip_gen: v5e
topology: v5e:2x2
jax: 0.10.0
libtpu: 0.0.40
codegen_flags: <defaults>
</compile_context>

<pallas_src>
import functools

import jax
import jax.numpy as jnp
from jax.experimental import pallas as pl
from jax.experimental.pallas import tpu as pltpu


# Safe on every generation: raises the 16 MiB (v5e) / 32 MiB (v6e, v7x) scoped
# defaults while staying under v7x's 64 MiB physical VMEM.  (Bump toward
# ~100 MiB on v5e/v6e if you enlarge the row tiles.)
_VMEM_LIMIT_BYTES = 48 * 1024 * 1024


def _round_up(x, m):
    return ((x + m - 1) // m) * m


def _pad2(a, rows, cols, dtype):
    """Zero-pad a 2-D array to (rows, cols) in `dtype`; no-op copy if aligned."""
    dtype = jnp.dtype(dtype)
    if a.shape == (rows, cols):
        return a.astype(dtype)
    out = jnp.zeros((rows, cols), dtype)
    return out.at[: a.shape[0], : a.shape[1]].set(a.astype(dtype))


# --------------------------------------------------------------------------
# Kernel 1: projection  support = x @ W      (tiled over node rows)
# --------------------------------------------------------------------------
def _proj_kernel(x_ref, w_ref, out_ref):
    # x_ref: (tm, F_in_p)  w_ref: (F_in_p, F_out_p)  out_ref: (tm, F_out_p)
    out_ref[...] = jnp.dot(
        x_ref[...], w_ref[...], preferred_element_type=jnp.float32
    ).astype(out_ref.dtype)


def _project(x_p, w_p, *, tm, out_dtype):
    n_pad, f_in_p = x_p.shape
    f_out_p = w_p.shape[1]
    in_bytes = jnp.dtype(x_p.dtype).itemsize
    cost = pl.CostEstimate(
        flops=2 * n_pad * f_in_p * f_out_p,
        transcendentals=0,
        bytes_accessed=in_bytes * (n_pad * f_in_p + f_in_p * f_out_p)
        + jnp.dtype(out_dtype).itemsize * n_pad * f_out_p,
    )
    return pl.pallas_call(
        _proj_kernel,
        out_shape=jax.ShapeDtypeStruct((n_pad, f_out_p), out_dtype),
        grid=(n_pad // tm,),
        in_specs=[
            pl.BlockSpec((tm, f_in_p), lambda i: (i, 0)),       # x row tile
            pl.BlockSpec((f_in_p, f_out_p), lambda i: (0, 0)),  # W (resident)
        ],
        out_specs=pl.BlockSpec((tm, f_out_p), lambda i: (i, 0)),
        compiler_params=pltpu.CompilerParams(
            dimension_semantics=("parallel",),
            vmem_limit_bytes=_VMEM_LIMIT_BYTES,
        ),
        cost_estimate=cost,
    )(x_p, w_p)


# --------------------------------------------------------------------------
# Kernel 2: aggregation  out = adj @ support + b   (rows x K-tiled contraction)
# --------------------------------------------------------------------------
def _agg_kernel(adj_ref, s_ref, b_ref, out_ref, acc_ref, *, apply_relu):
    # adj_ref: (tm, tk)  s_ref: (tk, F_out_p)  b_ref: (1, F_out_p) f32
    # out_ref: (tm, F_out_p)  acc_ref: (tm, F_out_p) f32 scratch
    @pl.when(pl.program_id(1) == 0)
    def _():
        acc_ref[...] = jnp.zeros_like(acc_ref)

    acc_ref[...] += jnp.dot(
        adj_ref[...], s_ref[...], preferred_element_type=jnp.float32
    )

    @pl.when(pl.program_id(1) == pl.num_programs(1) - 1)
    def _():
        y = acc_ref[...] + b_ref[...]
        if apply_relu:
            y = jnp.maximum(y, 0.0)
        out_ref[...] = y.astype(out_ref.dtype)


def _aggregate(adj_p, s_p, b_p, *, tm, tk, apply_relu, out_dtype):
    n_pad = adj_p.shape[0]
    f_out_p = s_p.shape[1]
    adj_bytes = jnp.dtype(adj_p.dtype).itemsize
    s_bytes = jnp.dtype(s_p.dtype).itemsize
    cost = pl.CostEstimate(
        flops=2 * n_pad * n_pad * f_out_p,
        transcendentals=0,
        bytes_accessed=adj_bytes * n_pad * n_pad
        + s_bytes * n_pad * f_out_p
        + 4 * f_out_p
        + jnp.dtype(out_dtype).itemsize * n_pad * f_out_p,
    )
    kernel = functools.partial(_agg_kernel, apply_relu=apply_relu)
    return pl.pallas_call(
        kernel,
        out_shape=jax.ShapeDtypeStruct((n_pad, f_out_p), out_dtype),
        grid=(n_pad // tm, n_pad // tk),
        in_specs=[
            pl.BlockSpec((tm, tk), lambda i, k: (i, k)),          # adj tile
            pl.BlockSpec((tk, f_out_p), lambda i, k: (k, 0)),     # support tile
            pl.BlockSpec((1, f_out_p), lambda i, k: (0, 0)),      # bias (resident)
        ],
        out_specs=pl.BlockSpec((tm, f_out_p), lambda i, k: (i, 0)),
        scratch_shapes=[pltpu.VMEM((tm, f_out_p), jnp.float32)],
        compiler_params=pltpu.CompilerParams(
            dimension_semantics=("parallel", "arbitrary"),
            vmem_limit_bytes=_VMEM_LIMIT_BYTES,
        ),
        cost_estimate=cost,
    )(adj_p, s_p, b_p)


# --------------------------------------------------------------------------
# One-time prepare (pad adj / weights / biases) + per-call apply
# --------------------------------------------------------------------------
def prepare_gcn(adj, w1, b1, w2, b2, *, mxu_dtype=jnp.bfloat16, tm=256):
    """Pad the per-graph / per-model tensors ONCE (adj is the dominant HBM
    stream; repadding it every forward would cost roughly an extra layer of
    traffic on this HBM-bound kernel)."""
    n = adj.shape[0]
    f_in, f_hid = w1.shape
    f_out = w2.shape[1]

    n_pad = _round_up(n, tm)
    tk = 512 if (n_pad % 512 == 0) else tm
    f_in_p = _round_up(f_in, 128)
    f_hid_p = _round_up(f_hid, 128)
    f_out_p = _round_up(f_out, 128)

    return {
        "adj": _pad2(adj, n_pad, n_pad, mxu_dtype),
        "w1": _pad2(w1, f_in_p, f_hid_p, mxu_dtype),
        "w2": _pad2(w2, f_hid_p, f_out_p, mxu_dtype),
        "b1": _pad2(b1[None, :], 1, f_hid_p, jnp.float32),
        "b2": _pad2(b2[None, :], 1, f_out_p, jnp.float32),
        "dims": (n, f_in, f_hid, f_out),
        "tiles": (tm, tk),
        "mxu_dtype": mxu_dtype,
    }


@functools.partial(
    jax.jit, static_argnames=("tm", "tk", "n", "f_out", "mxu_dtype")
)
def _gcn_apply(x, adj_p, w1_p, b1_p, w2_p, b2_p, *, tm, tk, n, f_out, mxu_dtype):
    n_pad = adj_p.shape[0]
    f_in_p = w1_p.shape[0]
    # Per-call padding touches only x (N x F_in), not the N^2 adjacency.
    x_p = _pad2(x, n_pad, f_in_p, mxu_dtype)

    # Layer 1: support1 = x @ W1 ; h = relu(adj @ support1 + b1)   (h in bf16)
    s1 = _project(x_p, w1_p, tm=tm, out_dtype=mxu_dtype)
    h = _aggregate(adj_p, s1, b1_p, tm=tm, tk=tk, apply_relu=True,
                   out_dtype=mxu_dtype)

    # Layer 2: support2 = h @ W2 ; out = adj @ support2 + b2        (out in f32)
    s2 = _project(h, w2_p, tm=tm, out_dtype=mxu_dtype)
    out = _aggregate(adj_p, s2, b2_p, tm=tm, tk=tk, apply_relu=False,
                     out_dtype=jnp.float32)

    return out[:n, :f_out]


def gcn_forward(x, adj, w1, b1, w2, b2, *, mxu_dtype=jnp.bfloat16, tm=256):
    """GCN forward: out = adj @ (relu(adj @ (x @ W1) + b1) @ W2) + b2.

    MXU operands are bf16 by default (f32 accumulation / bias / ReLU); pass
    mxu_dtype=jnp.float32 for a full-precision path.
    """
    params = prepare_gcn(adj, w1, b1, w2, b2, mxu_dtype=mxu_dtype, tm=tm)
    n, _, _, f_out = params["dims"]
    tm_, tk = params["tiles"]
    return _gcn_apply(
        x, params["adj"], params["w1"], params["b1"], params["w2"], params["b2"],
        tm=tm_, tk=tk, n=n, f_out=f_out, mxu_dtype=mxu_dtype,
    )


if __name__ == "__main__":
    # Small shapes consistent with the module: 200 nodes, nfeat=48, nhid=32,
    # nclass=7 (exercise both node-dim and feature-dim padding paths).
    NODES, NFEAT, NHID, NCLASS = 200, 48, 32, 7

    key = jax.random.PRNGKey(0)
    k_x, k_a, k_w1, k_b1, k_w2, k_b2 = jax.random.split(key, 6)

    # Features.
    x = jax.random.normal(k_x, (NODES, NFEAT), dtype=jnp.float32)

    # Symmetric, row-normalized adjacency with self loops (dense).
    a = (jax.random.uniform(k_a, (NODES, NODES)) < 0.05).astype(jnp.float32)
    a = jnp.maximum(a, a.T) + jnp.eye(NODES, dtype=jnp.float32)
    adj = a / jnp.sum(a, axis=1, keepdims=True)

    # GraphConvolution parameters, PyTorch layout (in_features, out_features).
    w1 = jax.random.normal(k_w1, (NFEAT, NHID), dtype=jnp.float32) / jnp.sqrt(NFEAT)
    b1 = jax.random.normal(k_b1, (NHID,), dtype=jnp.float32) * 0.01
    w2 = jax.random.normal(k_w2, (NHID, NCLASS), dtype=jnp.float32) / jnp.sqrt(NHID)
    b2 = jax.random.normal(k_b2, (NCLASS,), dtype=jnp.float32) * 0.01

    out = gcn_forward(x, adj, w1, b1, w2, b2)
    out = jax.block_until_ready(out)
    assert out.shape == (NODES, NCLASS)

    # Matched-precision reference: same bf16 quantization of the MXU operands
    # (f32 accumulation), exact PyTorch association adj @ (x @ W) + b.
    bf = lambda v: v.astype(jnp.bfloat16).astype(jnp.float32)
    s1_ref = bf(x) @ bf(w1)
    h_ref = jnp.maximum(bf(adj) @ bf(s1_ref) + b1[None, :], 0.0)
    s2_ref = bf(h_ref) @ bf(w2)
    ref = bf(adj) @ bf(s2_ref) + b2[None, :]
    assert jnp.allclose(out, ref, atol=5e-3, rtol=5e-3), "mismatch vs matched-precision reference"

    # Full-f32 PyTorch-semantics sanity check (loose tolerance for the bf16 path).
    h_f32 = jnp.maximum(adj @ (x @ w1) + b1[None, :], 0.0)
    ref_f32 = adj @ (h_f32 @ w2) + b2[None, :]
    assert jnp.allclose(out, ref_f32, atol=5e-2, rtol=5e-2), "mismatch vs f32 reference"

    print("KERNEL_OK")
</pallas_src>

<mosaic_0001>
module attributes {stable_mosaic.version = 11 : i64} {
  func.func @_proj_kernel(%arg0: i32, %arg1: memref<256x128xbf16, #tpu.memory_space<vmem>>, %arg2: memref<128x128xbf16, #tpu.memory_space<vmem>>, %arg3: memref<256x128xbf16, #tpu.memory_space<vmem>>) attributes {dimension_semantics = [#tpu.dimension_semantics<parallel>], iteration_bounds = array<i64: 1>, scalar_prefetch = 0 : i64, scratch_operands = 0 : i64, tpu.core_type = #tpu.core_type<tc>, window_params = [{transform_indices = @transform_0, window_bounds = array<i64: 256, 128>}, {pipeline_mode = #tpu.pipeline_mode<synchronous>, transform_indices = @transform_1, window_bounds = array<i64: 128, 128>}, {transform_indices = @transform_2, window_bounds = array<i64: 256, 128>}]} {
    %c0 = arith.constant 0 : index
    %c0_0 = arith.constant 0 : index
    %0 = vector.load %arg1[%c0, %c0_0] : memref<256x128xbf16, #tpu.memory_space<vmem>>, vector<256x128xbf16>
    %c0_1 = arith.constant 0 : index
    %c0_2 = arith.constant 0 : index
    %1 = vector.load %arg2[%c0_1, %c0_2] : memref<128x128xbf16, #tpu.memory_space<vmem>>, vector<128x128xbf16>
    %cst = arith.constant dense<0.000000e+00> : vector<256x128xf32>
    %2 = tpu.matmul %0, %1, %cst {dimension_numbers = #tpu.dot_dimension_numbers<[1], [0], [0], [1], [0, 0, 1, 1], [], []>} : vector<256x128xbf16>, vector<128x128xbf16>, vector<256x128xf32> -> vector<256x128xf32>
    %3 = arith.truncf %2 : vector<256x128xf32> to vector<256x128xbf16>
    %c0_3 = arith.constant 0 : index
    %c0_4 = arith.constant 0 : index
    %4 = vector.load %arg3[%c0_3, %c0_4] : memref<256x128xbf16, #tpu.memory_space<vmem>>, vector<256x128xbf16>
    tpu.vector_store %arg3[%c0_3, %c0_4], %3 {strides = array<i32>} : memref<256x128xbf16, #tpu.memory_space<vmem>>, vector<256x128xbf16>,
    return
  }
  func.func @transform_0(%arg0: i32) -> (i32, i32) {
    %c0_i32 = arith.constant 0 : i32
    %c0_i32_0 = arith.constant 0 : i32
    return %arg0, %c0_i32 : i32, i32
  }
  func.func @transform_1(%arg0: i32) -> (i32, i32) {
    %c0_i32 = arith.constant 0 : i32
    %c0_i32_0 = arith.constant 0 : i32
    %c0_i32_1 = arith.constant 0 : i32
    return %c0_i32, %c0_i32_0 : i32, i32
  }
  func.func @transform_2(%arg0: i32) -> (i32, i32) {
    %c0_i32 = arith.constant 0 : i32
    %c0_i32_0 = arith.constant 0 : i32
    return %arg0, %c0_i32 : i32, i32
  }
}

module attributes {stable_mosaic.version = 11 : i64} {
  func.func @_agg_kernel(%arg0: i32, %arg1: i32, %arg2: memref<256x256xbf16, #tpu.memory_space<vmem>>, %arg3: memref<256x128xbf16, #tpu.memory_space<vmem>>, %arg4: memref<1x128xf32, #tpu.memory_space<vmem>>, %arg5: memref<256x128xf32, #tpu.memory_space<vmem>>, %arg6: memref<256x128xf32, #tpu.memory_space<vmem>>) attributes {dimension_semantics = [#tpu.dimension_semantics<parallel>, #tpu.dimension_semantics<arbitrary>], iteration_bounds = array<i64: 1, 1>, scalar_prefetch = 0 : i64, scratch_operands = 1 : i64, tpu.core_type = #tpu.core_type<tc>, window_params = [{transform_indices = @transform_0, window_bounds = array<i64: 256, 256>}, {transform_indices = @transform_1, window_bounds = array<i64: 256, 128>}, {pipeline_mode = #tpu.pipeline_mode<synchronous>, transform_indices = @transform_2, window_bounds = array<i64: 1, 128>}, {transform_indices = @transform_3, window_bounds = array<i64: 256, 128>}]} {
    %c0_i32 = arith.constant 0 : i32
    %0 = arith.cmpi eq, %arg1, %c0_i32 : i32
    %1 = arith.extui %0 : i1 to i32
    %c0_i32_0 = arith.constant 0 : i32
    %2 = arith.cmpi ne, %1, %c0_i32_0 : i32
    scf.if %2 {
      %cst_10 = arith.constant 0.000000e+00 : f32
      %12 = vector.broadcast %cst_10 : f32 to vector<256x128xf32>
      %c0_11 = arith.constant 0 : index
      %c0_12 = arith.constant 0 : index
      %13 = vector.load %arg6[%c0_11, %c0_12] : memref<256x128xf32, #tpu.memory_space<vmem>>, vector<256x128xf32>
      tpu.vector_store %arg6[%c0_11, %c0_12], %12 {strides = array<i32>} : memref<256x128xf32, #tpu.memory_space<vmem>>, vector<256x128xf32>,
    } else {
    }
    %c0 = arith.constant 0 : index
    %c0_1 = arith.constant 0 : index
    %3 = vector.load %arg6[%c0, %c0_1] : memref<256x128xf32, #tpu.memory_space<vmem>>, vector<256x128xf32>
    %c0_2 = arith.constant 0 : index
    %c0_3 = arith.constant 0 : index
    %4 = vector.load %arg2[%c0_2, %c0_3] : memref<256x256xbf16, #tpu.memory_space<vmem>>, vector<256x256xbf16>
    %c0_4 = arith.constant 0 : index
    %c0_5 = arith.constant 0 : index
    %5 = vector.load %arg3[%c0_4, %c0_5] : memref<256x128xbf16, #tpu.memory_space<vmem>>, vector<256x128xbf16>
    %cst = arith.constant dense<0.000000e+00> : vector<256x128xf32>
    %6 = tpu.matmul %4, %5, %cst {dimension_numbers = #tpu.dot_dimension_numbers<[1], [0], [0], [1], [0, 0, 1, 1], [], []>} : vector<256x256xbf16>, vector<256x128xbf16>, vector<256x128xf32> -> vector<256x128xf32>
    %7 = arith.addf %3, %6 : vector<256x128xf32>
    %c0_6 = arith.constant 0 : index
    %c0_7 = arith.constant 0 : index
    %8 = vector.load %arg6[%c0_6, %c0_7] : memref<256x128xf32, #tpu.memory_space<vmem>>, vector<256x128xf32>
    tpu.vector_store %arg6[%c0_6, %c0_7], %7 {strides = array<i32>} : memref<256x128xf32, #tpu.memory_space<vmem>>, vector<256x128xf32>,
    %c0_i32_8 = arith.constant 0 : i32
    %9 = arith.cmpi eq, %arg1, %c0_i32_8 : i32
    %10 = arith.extui %9 : i1 to i32
    %c0_i32_9 = arith.constant 0 : i32
    %11 = arith.cmpi ne, %10, %c0_i32_9 : i32
    scf.if %11 {
      %c0_10 = arith.constant 0 : index
      %c0_11 = arith.constant 0 : index
      %12 = vector.load %arg6[%c0_10, %c0_11] : memref<256x128xf32, #tpu.memory_space<vmem>>, vector<256x128xf32>
      %c0_12 = arith.constant 0 : index
      %c0_13 = arith.constant 0 : index
      %13 = vector.load %arg4[%c0_12, %c0_13] : memref<1x128xf32, #tpu.memory_space<vmem>>, vector<1x128xf32>
      %14 = vector.broadcast %13 : vector<1x128xf32> to vector<256x128xf32>
      %15 = arith.addf %12, %14 : vector<256x128xf32>
      %c0_14 = arith.constant 0 : index
      %c0_15 = arith.constant 0 : index
      %16 = vector.load %arg5[%c0_14, %c0_15] : memref<256x128xf32, #tpu.memory_space<vmem>>, vector<256x128xf32>
      tpu.vector_store %arg5[%c0_14, %c0_15], %15 {strides = array<i32>} : memref<256x128xf32, #tpu.memory_space<vmem>>, vector<256x128xf32>,
    } else {
    }
    return
  }
  func.func @transform_0(%arg0: i32, %arg1: i32) -> (i32, i32) {
    %c0_i32 = arith.constant 0 : i32
    return %arg0, %arg1 : i32, i32
  }
  func.func @transform_1(%arg0: i32, %arg1: i32) -> (i32, i32) {
    %c0_i32 = arith.constant 0 : i32
    %c0_i32_0 = arith.constant 0 : i32
    return %arg1, %c0_i32 : i32, i32
  }
  func.func @transform_2(%arg0: i32, %arg1: i32) -> (i32, i32) {
    %c0_i32 = arith.constant 0 : i32
    %c0_i32_0 = arith.constant 0 : i32
    %c0_i32_1 = arith.constant 0 : i32
    return %c0_i32, %c0_i32_0 : i32, i32
  }
  func.func @transform_3(%arg0: i32, %arg1: i32) -> (i32, i32) {
    %c0_i32 = arith.constant 0 : i32
    %c0_i32_0 = arith.constant 0 : i32
    return %arg0, %c0_i32 : i32, i32
  }
}

module attributes {stable_mosaic.version = 11 : i64} {
  func.func @_agg_kernel(%arg0: i32, %arg1: i32, %arg2: memref<256x256xbf16, #tpu.memory_space<vmem>>, %arg3: memref<256x128xbf16, #tpu.memory_space<vmem>>, %arg4: memref<1x128xf32, #tpu.memory_space<vmem>>, %arg5: memref<256x128xbf16, #tpu.memory_space<vmem>>, %arg6: memref<256x128xf32, #tpu.memory_space<vmem>>) attributes {dimension_semantics = [#tpu.dimension_semantics<parallel>, #tpu.dimension_semantics<arbitrary>], iteration_bounds = array<i64: 1, 1>, scalar_prefetch = 0 : i64, scratch_operands = 1 : i64, tpu.core_type = #tpu.core_type<tc>, window_params = [{transform_indices = @transform_0, window_bounds = array<i64: 256, 256>}, {transform_indices = @transform_1, window_bounds = array<i64: 256, 128>}, {pipeline_mode = #tpu.pipeline_mode<synchronous>, transform_indices = @transform_2, window_bounds = array<i64: 1, 128>}, {transform_indices = @transform_3, window_bounds = array<i64: 256, 128>}]} {
    %c0_i32 = arith.constant 0 : i32
    %0 = arith.cmpi eq, %arg1, %c0_i32 : i32
    %1 = arith.extui %0 : i1 to i32
    %c0_i32_0 = arith.constant 0 : i32
    %2 = arith.cmpi ne, %1, %c0_i32_0 : i32
    scf.if %2 {
      %cst_10 = arith.constant 0.000000e+00 : f32
      %12 = vector.broadcast %cst_10 : f32 to vector<256x128xf32>
      %c0_11 = arith.constant 0 : index
      %c0_12 = arith.constant 0 : index
      %13 = vector.load %arg6[%c0_11, %c0_12] : memref<256x128xf32, #tpu.memory_space<vmem>>, vector<256x128xf32>
      tpu.vector_store %arg6[%c0_11, %c0_12], %12 {strides = array<i32>} : memref<256x128xf32, #tpu.memory_space<vmem>>, vector<256x128xf32>,
    } else {
    }
    %c0 = arith.constant 0 : index
    %c0_1 = arith.constant 0 : index
    %3 = vector.load %arg6[%c0, %c0_1] : memref<256x128xf32, #tpu.memory_space<vmem>>, vector<256x128xf32>
    %c0_2 = arith.constant 0 : index
    %c0_3 = arith.constant 0 : index
    %4 = vector.load %arg2[%c0_2, %c0_3] : memref<256x256xbf16, #tpu.memory_space<vmem>>, vector<256x256xbf16>
    %c0_4 = arith.constant 0 : index
    %c0_5 = arith.constant 0 : index
    %5 = vector.load %arg3[%c0_4, %c0_5] : memref<256x128xbf16, #tpu.memory_space<vmem>>, vector<256x128xbf16>
    %cst = arith.constant dense<0.000000e+00> : vector<256x128xf32>
    %6 = tpu.matmul %4, %5, %cst {dimension_numbers = #tpu.dot_dimension_numbers<[1], [0], [0], [1], [0, 0, 1, 1], [], []>} : vector<256x256xbf16>, vector<256x128xbf16>, vector<256x128xf32> -> vector<256x128xf32>
    %7 = arith.addf %3, %6 : vector<256x128xf32>
    %c0_6 = arith.constant 0 : index
    %c0_7 = arith.constant 0 : index
    %8 = vector.load %arg6[%c0_6, %c0_7] : memref<256x128xf32, #tpu.memory_space<vmem>>, vector<256x128xf32>
    tpu.vector_store %arg6[%c0_6, %c0_7], %7 {strides = array<i32>} : memref<256x128xf32, #tpu.memory_space<vmem>>, vector<256x128xf32>,
    %c0_i32_8 = arith.constant 0 : i32
    %9 = arith.cmpi eq, %arg1, %c0_i32_8 : i32
    %10 = arith.extui %9 : i1 to i32
    %c0_i32_9 = arith.constant 0 : i32
    %11 = arith.cmpi ne, %10, %c0_i32_9 : i32
    scf.if %11 {
      %c0_10 = arith.constant 0 : index
      %c0_11 = arith.constant 0 : index
      %12 = vector.load %arg6[%c0_10, %c0_11] : memref<256x128xf32, #tpu.memory_space<vmem>>, vector<256x128xf32>
      %c0_12 = arith.constant 0 : index
      %c0_13 = arith.constant 0 : index
      %13 = vector.load %arg4[%c0_12, %c0_13] : memref<1x128xf32, #tpu.memory_space<vmem>>, vector<1x128xf32>
      %14 = vector.broadcast %13 : vector<1x128xf32> to vector<256x128xf32>
      %15 = arith.addf %12, %14 : vector<256x128xf32>
      %cst_14 = arith.constant 0.000000e+00 : f32
      %16 = vector.broadcast %cst_14 : f32 to vector<256x128xf32>
      %17 = arith.maximumf %15, %16 : vector<256x128xf32>
      %18 = arith.truncf %17 : vector<256x128xf32> to vector<256x128xbf16>
      %c0_15 = arith.constant 0 : index
      %c0_16 = arith.constant 0 : index
      %19 = vector.load %arg5[%c0_15, %c0_16] : memref<256x128xbf16, #tpu.memory_space<vmem>>, vector<256x128xbf16>
      tpu.vector_store %arg5[%c0_15, %c0_16], %18 {strides = array<i32>} : memref<256x128xbf16, #tpu.memory_space<vmem>>, vector<256x128xbf16>,
    } else {
    }
    return
  }
  func.func @transform_0(%arg0: i32, %arg1: i32) -> (i32, i32) {
    %c0_i32 = arith.constant 0 : i32
    return %arg0, %arg1 : i32, i32
  }
  func.func @transform_1(%arg0: i32, %arg1: i32) -> (i32, i32) {
    %c0_i32 = arith.constant 0 : i32
    %c0_i32_0 = arith.constant 0 : i32
    return %arg1, %c0_i32 : i32, i32
  }
  func.func @transform_2(%arg0: i32, %arg1: i32) -> (i32, i32) {
    %c0_i32 = arith.constant 0 : i32
    %c0_i32_0 = arith.constant 0 : i32
    %c0_i32_1 = arith.constant 0 : i32
    return %c0_i32, %c0_i32_0 : i32, i32
  }
  func.func @transform_3(%arg0: i32, %arg1: i32) -> (i32, i32) {
    %c0_i32 = arith.constant 0 : i32
    %c0_i32_0 = arith.constant 0 : i32
    return %arg0, %c0_i32 : i32, i32
  }
}

</mosaic_0001>

<llo_original>
// kernel: _gcn_apply.4
$region0: #{_gcn_apply.4}
  #allocation0 [shape = 'u32[]', space=smem, size = 0x4, offset = 0x4, fixed_abs, tag = 'smem constant byte address 0x4 - core index']
  #allocation1 [shape = 'u32[72,128]{1,0:T(1,128)}', space=vmem, size = 0x9000, scoped, tag = 'internal scratch']
  %s0 = inlined_call_operand.vmem [shape: bf16[256,128], index: 0, kind: input, shape index: {}]
  %s1 = inlined_call_operand.vmem [shape: bf16[128,128], index: 1, kind: input, shape index: {}]
  %s2 = inlined_call_operand.vmem [shape: bf16[256,128], index: 2, kind: output, shape index: {}]
  %s3 = sld [smem:[#allocation0]]
  $region18: #{_gcn_apply.4} parent=0
    _
  %s5 = ssub.s32 1, %s3
  %s6 = scalar_select 0, %s5, %s3
  // Predicated region
  $region2: #{_gcn_apply.4} parent=0 // pred_check
    _
  $region3: #{_gcn_apply.4} parent=0 // pred_check_branch
    %8 = sbr.rel (0) target = $region5
  $region4: #{_gcn_apply.4} parent=0 // pred_region
    _
  $region5: #{_gcn_apply.4} parent=0 // pred_fallthru
    _
  // Predicated region
  $region6: #{_gcn_apply.4} parent=0 // pred_check
    _
  $region7: #{_gcn_apply.4} parent=0 // pred_check_branch
    %10 = sbr.rel (0) target = $region9
  $region8: #{_gcn_apply.4} parent=0 // pred_region
    _
  $region9: #{_gcn_apply.4} parent=0 // pred_fallthru
    _
  %v11 = vld [vmem:[%s0] sm:$0xf]
  %v12 = vld [vmem:[%s0 + $0x4] sm:$0xf]
  %v13 = vld [vmem:[%s0 + $0x8] sm:$0xf]
  %v14 = vld [vmem:[%s0 + $0xc] sm:$0xf]
  %v15 = vld [vmem:[%s0 + $0x10] sm:$0xf]
  %v16 = vld [vmem:[%s0 + $0x14] sm:$0xf]
  %v17 = vld [vmem:[%s0 + $0x18] sm:$0xf]
  %v18 = vld [vmem:[%s0 + $0x1c] sm:$0xf]
  %v19 = vld [vmem:[%s0 + $0x20] sm:$0xf]
  %v20 = vld [vmem:[%s0 + $0x24] sm:$0xf]
  %v21 = vld [vmem:[%s0 + $0x28] sm:$0xf]
  %v22 = vld [vmem:[%s0 + $0x2c] sm:$0xf]
  %v23 = vld [vmem:[%s0 + $0x30] sm:$0xf]
  %v24 = vld [vmem:[%s0 + $0x34] sm:$0xf]
  %v25 = vld [vmem:[%s0 + $0x38] sm:$0xf]
  %v26 = vld [vmem:[%s0 + $0x3c] sm:$0xf]
  %v27 = vld [vmem:[%s0 + $0x40] sm:$0xf]
  %v28 = vld [vmem:[%s0 + $0x44] sm:$0xf]
  %v29 = vld [vmem:[%s0 + $0x48] sm:$0xf]
  %v30 = vld [vmem:[%s0 + $0x4c] sm:$0xf]
  %v31 = vld [vmem:[%s0 + $0x50] sm:$0xf]
  %v32 = vld [vmem:[%s0 + $0x54] sm:$0xf]
  %v33 = vld [vmem:[%s0 + $0x58] sm:$0xf]
  %v34 = vld [vmem:[%s0 + $0x5c] sm:$0xf]
  %v35 = vld [vmem:[%s0 + $0x60] sm:$0xf]
  %v36 = vld [vmem:[%s0 + $0x64] sm:$0xf]
  %v37 = vld [vmem:[%s0 + $0x68] sm:$0xf]
  %v38 = vld [vmem:[%s0 + $0x6c] sm:$0xf]
  %v39 = vld [vmem:[%s0 + $0x70] sm:$0xf]
  %v40 = vld [vmem:[%s0 + $0x74] sm:$0xf]
  %v41 = vld [vmem:[%s0 + $0x78] sm:$0xf]
  %v42 = vld [vmem:[%s0 + $0x7c] sm:$0xf]
  %v43 = vld [vmem:[%s1] sm:$0xf]
  %v44 = vld [vmem:[%s1 + $0x4] sm:$0xf]
  %v45 = vld [vmem:[%s1 + $0x8] sm:$0xf]
  %v46 = vld [vmem:[%s1 + $0xc] sm:$0xf]
  %v47 = vld [vmem:[%s1 + $0x10] sm:$0xf]
  %v48 = vld [vmem:[%s1 + $0x14] sm:$0xf]
  %v49 = vld [vmem:[%s1 + $0x18] sm:$0xf]
  %v50 = vld [vmem:[%s1 + $0x1c] sm:$0xf]
  %v51 = vld [vmem:[%s1 + $0x20] sm:$0xf]
  %v52 = vld [vmem:[%s1 + $0x24] sm:$0xf]
  %v53 = vld [vmem:[%s1 + $0x28] sm:$0xf]
  %v54 = vld [vmem:[%s1 + $0x2c] sm:$0xf]
  %v55 = vld [vmem:[%s1 + $0x30] sm:$0xf]
  %v56 = vld [vmem:[%s1 + $0x34] sm:$0xf]
  %v57 = vld [vmem:[%s1 + $0x38] sm:$0xf]
  %v58 = vld [vmem:[%s1 + $0x3c] sm:$0xf]
  %v91 = vunpack.c.l.b16 %v11
  %v92 = vunpack.c.l.b16 %v12
  %v93 = vunpack.c.l.b16 %v13
  %v94 = vunpack.c.l.b16 %v14
  %v95 = vunpack.c.l.b16 %v15
  %v96 = vunpack.c.l.b16 %v16
  %v97 = vunpack.c.l.b16 %v17
  %v98 = vunpack.c.l.b16 %v18
  %v99 = vunpack.c.l.b16 %v19
  %v100 = vunpack.c.l.b16 %v20
  %v101 = vunpack.c.l.b16 %v21
  %v102 = vunpack.c.l.b16 %v22
  %v103 = vunpack.c.l.b16 %v23
  %v104 = vunpack.c.l.b16 %v24
  %v105 = vunpack.c.l.b16 %v25
  %v106 = vunpack.c.l.b16 %v26
  %v107 = vunpack.c.l.b16 %v27
  %v108 = vunpack.c.l.b16 %v28
  %v109 = vunpack.c.l.b16 %v29
  %v110 = vunpack.c.l.b16 %v30
  %v111 = vunpack.c.l.b16 %v31
  %v112 = vunpack.c.l.b16 %v32
  %v113 = vunpack.c.l.b16 %v33
  %v114 = vunpack.c.l.b16 %v34
  %v115 = vunpack.c.l.b16 %v35
  %v116 = vunpack.c.l.b16 %v36
  %v117 = vunpack.c.l.b16 %v37
  %v118 = vunpack.c.l.b16 %v38
  %v119 = vunpack.c.l.b16 %v39
  %v120 = vunpack.c.l.b16 %v40
  %v121 = vunpack.c.l.b16 %v41
  %v122 = vunpack.c.l.b16 %v42
  %v123 = vpack.c.b16 %v92, %v91
  %v124 = vpack.c.b16 %v94, %v93
  %v125 = vpack.c.b16 %v96, %v95
  %v126 = vpack.c.b16 %v98, %v97
  %v127 = vpack.c.b16 %v100, %v99
  %v128 = vpack.c.b16 %v102, %v101
  %v129 = vpack.c.b16 %v104, %v103
  %v130 = vpack.c.b16 %v106, %v105
  %v131 = vpack.c.b16 %v108, %v107
  %v132 = vpack.c.b16 %v110, %v109
  %v133 = vpack.c.b16 %v112, %v111
  %v134 = vpack.c.b16 %v114, %v113
  %v135 = vpack.c.b16 %v116, %v115
  %v136 = vpack.c.b16 %v118, %v117
  %v137 = vpack.c.b16 %v120, %v119
  %v138 = vpack.c.b16 %v122, %v121
  %v171 = vunpack.c.l.b16 %v43
  %v172 = vunpack.c.l.b16 %v44
  %v173 = vunpack.c.l.b16 %v45
  %v174 = vunpack.c.l.b16 %v46
  %v175 = vunpack.c.l.b16 %v47
  %v176 = vunpack.c.l.b16 %v48
  %v177 = vunpack.c.l.b16 %v49
  %v178 = vunpack.c.l.b16 %v50
  %v179 = vunpack.c.l.b16 %v51
  %v180 = vunpack.c.l.b16 %v52
  %v181 = vunpack.c.l.b16 %v53
  %v182 = vunpack.c.l.b16 %v54
  %v183 = vunpack.c.l.b16 %v55
  %v184 = vunpack.c.l.b16 %v56
  %v185 = vunpack.c.l.b16 %v57
  %v186 = vunpack.c.l.b16 %v58
  %v187 = vpack.c.b16 %v172, %v171
  %v188 = vpack.c.b16 %v174, %v173
  %v189 = vpack.c.b16 %v176, %v175
  %v190 = vpack.c.b16 %v178, %v177
  %v191 = vpack.c.b16 %v180, %v179
  %v192 = vpack.c.b16 %v182, %v181
  %v193 = vpack.c.b16 %v184, %v183
  %v194 = vpack.c.b16 %v186, %v185
  %203 = vmatpush.bf16.msra.mxu0 %v194
  %204 = vmatpush.bf16.msra.mxu0 %v193
  %205 = vmatpush.bf16.msra.mxu0 %v192
  %206 = vmatpush.bf16.msra.mxu0 %v191
  %207 = vmatpush.bf16.msra.mxu0 %v190
  %208 = vmatpush.bf16.msra.mxu0 %v189
  %209 = vmatpush.bf16.msra.mxu0 %v188
  %210 = vmatpush.bf16.msra.mxu0 %v187
  %211 = vmatmul.bf16.gmra.mxu0 %v123
  %v212 = vpop.f32.mrf.mxu0
  %v213 = vadd.f32 0.0, %v212
  %v214 = vpop.f32.mrf.mxu0
  %v215 = vadd.f32 0.0, %v214
  %216 = vmatmul.bf16.gmra.mxu0 %v124
  %v217 = vpop.f32.mrf.mxu0
  %v218 = vadd.f32 0.0, %v217
  %v219 = vpop.f32.mrf.mxu0
  %v220 = vadd.f32 0.0, %v219
  %221 = vmatmul.bf16.gmra.mxu0 %v125
  %v222 = vpop.f32.mrf.mxu0
  %v223 = vadd.f32 0.0, %v222
  %v224 = vpop.f32.mrf.mxu0
  %v225 = vadd.f32 0.0, %v224
  %226 = vmatmul.bf16.gmra.mxu0 %v126
  %v227 = vpop.f32.mrf.mxu0
  %v228 = vadd.f32 0.0, %v227
  %v229 = vpop.f32.mrf.mxu0
  %v230 = vadd.f32 0.0, %v229
  %231 = vmatmul.bf16.gmra.mxu0 %v127
  %v232 = vpop.f32.mrf.mxu0
  %v233 = vadd.f32 0.0, %v232
  %v234 = vpop.f32.mrf.mxu0
  %v235 = vadd.f32 0.0, %v234
  %236 = vmatmul.bf16.gmra.mxu0 %v128
  %v237 = vpop.f32.mrf.mxu0
  %v238 = vadd.f32 0.0, %v237
  %v239 = vpop.f32.mrf.mxu0
  %v240 = vadd.f32 0.0, %v239
  %241 = vmatmul.bf16.gmra.mxu0 %v129
  %v242 = vpop.f32.mrf.mxu0
  %v243 = vadd.f32 0.0, %v242
  %v244 = vpop.f32.mrf.mxu0
  %v245 = vadd.f32 0.0, %v244
  %246 = vmatmul.bf16.gmra.mxu0 %v130
  %v247 = vpop.f32.mrf.mxu0
  %v248 = vadd.f32 0.0, %v247
  %v249 = vpop.f32.mrf.mxu0
  %v250 = vadd.f32 0.0, %v249
  %251 = vmatmul.bf16.gmra.mxu0 %v131
  %v252 = vpop.f32.mrf.mxu0
  %v253 = vadd.f32 0.0, %v252
  %v254 = vpop.f32.mrf.mxu0
  %v255 = vadd.f32 0.0, %v254
  %256 = vmatmul.bf16.gmra.mxu0 %v132
  %v257 = vpop.f32.mrf.mxu0
  %v258 = vadd.f32 0.0, %v257
  %v259 = vpop.f32.mrf.mxu0
  %v260 = vadd.f32 0.0, %v259
  %261 = vmatmul.bf16.gmra.mxu0 %v133
  %v262 = vpop.f32.mrf.mxu0
  %v263 = vadd.f32 0.0, %v262
  %v264 = vpop.f32.mrf.mxu0
  %v265 = vadd.f32 0.0, %v264
  %266 = vmatmul.bf16.gmra.mxu0 %v134
  %v267 = vpop.f32.mrf.mxu0
  %v268 = vadd.f32 0.0, %v267
  %v269 = vpop.f32.mrf.mxu0
  %v270 = vadd.f32 0.0, %v269
  %271 = vmatmul.bf16.gmra.mxu0 %v135
  %v272 = vpop.f32.mrf.mxu0
  %v273 = vadd.f32 0.0, %v272
  %v274 = vpop.f32.mrf.mxu0
  %v275 = vadd.f32 0.0, %v274
  %276 = vmatmul.bf16.gmra.mxu0 %v136
  %v277 = vpop.f32.mrf.mxu0
  %v278 = vadd.f32 0.0, %v277
  %v279 = vpop.f32.mrf.mxu0
  %v280 = vadd.f32 0.0, %v279
  %281 = vmatmul.bf16.gmra.mxu0 %v137
  %v282 = vpop.f32.mrf.mxu0
  %v283 = vadd.f32 0.0, %v282
  %v284 = vpop.f32.mrf.mxu0
  %v285 = vadd.f32 0.0, %v284
  %286 = vmatmul.bf16.gmra.mxu0 %v138
  %v287 = vpop.f32.mrf.mxu0
  %v288 = vadd.f32 0.0, %v287
  %v289 = vpop.f32.mrf.mxu0
  %v290 = vadd.f32 0.0, %v289
  %291 = vdwg.mxu0
  %v292 = vpack.c.bf16 %v213, %v213
  %v293 = vpack.c.bf16 %v215, %v215
  %v294 = vpack.c.bf16 %v218, %v218
  %v295 = vpack.c.bf16 %v220, %v220
  %v296 = vpack.c.bf16 %v223, %v223
  %v297 = vpack.c.bf16 %v225, %v225
  %v298 = vpack.c.bf16 %v228, %v228
  %v299 = vpack.c.bf16 %v230, %v230
  %v300 = vpack.c.bf16 %v233, %v233
  %v301 = vpack.c.bf16 %v235, %v235
  %v302 = vpack.c.bf16 %v238, %v238
  %v303 = vpack.c.bf16 %v240, %v240
  %v304 = vpack.c.bf16 %v243, %v243
  %v305 = vpack.c.bf16 %v245, %v245
  %v306 = vpack.c.bf16 %v248, %v248
  %v307 = vpack.c.bf16 %v250, %v250
  %v308 = vpack.c.bf16 %v253, %v253
  %v309 = vpack.c.bf16 %v255, %v255
  %v310 = vpack.c.bf16 %v258, %v258
  %v311 = vpack.c.bf16 %v260, %v260
  %v312 = vpack.c.bf16 %v263, %v263
  %v313 = vpack.c.bf16 %v265, %v265
  %v314 = vpack.c.bf16 %v268, %v268
  %v315 = vpack.c.bf16 %v270, %v270
  %v316 = vpack.c.bf16 %v273, %v273
  %v317 = vpack.c.bf16 %v275, %v275
  %v318 = vpack.c.bf16 %v278, %v278
  %v319 = vpack.c.bf16 %v280, %v280
  %v320 = vpack.c.bf16 %v283, %v283
  %v321 = vpack.c.bf16 %v285, %v285
  %v322 = vpack.c.bf16 %v288, %v288
  %v323 = vpack.c.bf16 %v290, %v290
  %324 = vst [vmem:[%s2] sm:$0xf] %v292
  %325 = vst [vmem:[%s2 + $0x4] sm:$0xf] %v293
  %326 = vst [vmem:[%s2 + $0x8] sm:$0xf] %v294
  %327 = vst [vmem:[%s2 + $0xc] sm:$0xf] %v295
  %328 = vst [vmem:[%s2 + $0x10] sm:$0xf] %v296
  %329 = vst [vmem:[%s2 + $0x14] sm:$0xf] %v297
  %330 = vst [vmem:[%s2 + $0x18] sm:$0xf] %v298
  %331 = vst [vmem:[%s2 + $0x1c] sm:$0xf] %v299
  %332 = vst [vmem:[%s2 + $0x20] sm:$0xf] %v300
  %333 = vst [vmem:[%s2 + $0x24] sm:$0xf] %v301
  %334 = vst [vmem:[%s2 + $0x28] sm:$0xf] %v302
  %335 = vst [vmem:[%s2 + $0x2c] sm:$0xf] %v303
  %336 = vst [vmem:[%s2 + $0x30] sm:$0xf] %v304
  %337 = vst [vmem:[%s2 + $0x34] sm:$0xf] %v305
  %338 = vst [vmem:[%s2 + $0x38] sm:$0xf] %v306
  %339 = vst [vmem:[%s2 + $0x3c] sm:$0xf] %v307
  %340 = vst [vmem:[%s2 + $0x40] sm:$0xf] %v308
  %341 = vst [vmem:[%s2 + $0x44] sm:$0xf] %v309
  %342 = vst [vmem:[%s2 + $0x48] sm:$0xf] %v310
  %343 = vst [vmem:[%s2 + $0x4c] sm:$0xf] %v311
  %344 = vst [vmem:[%s2 + $0x50] sm:$0xf] %v312
  %345 = vst [vmem:[%s2 + $0x54] sm:$0xf] %v313
  %346 = vst [vmem:[%s2 + $0x58] sm:$0xf] %v314
  %347 = vst [vmem:[%s2 + $0x5c] sm:$0xf] %v315
  %348 = vst [vmem:[%s2 + $0x60] sm:$0xf] %v316
  %349 = vst [vmem:[%s2 + $0x64] sm:$0xf] %v317
  %350 = vst [vmem:[%s2 + $0x68] sm:$0xf] %v318
  %351 = vst [vmem:[%s2 + $0x6c] sm:$0xf] %v319
  %352 = vst [vmem:[%s2 + $0x70] sm:$0xf] %v320
  %353 = vst [vmem:[%s2 + $0x74] sm:$0xf] %v321
  %354 = vst [vmem:[%s2 + $0x78] sm:$0xf] %v322
  %355 = vst [vmem:[%s2 + $0x7c] sm:$0xf] %v323
  // Predicated region
  $region10: #{_gcn_apply.4} parent=0 // pred_check
    _
  $region11: #{_gcn_apply.4} parent=0 // pred_check_branch
    %357 = sbr.rel (0) target = $region13
  $region12: #{_gcn_apply.4} parent=0 // pred_region
    _
  $region13: #{_gcn_apply.4} parent=0 // pred_fallthru
    _
  // Predicated region
  $region14: #{_gcn_apply.4} parent=0 // pred_check
    _
  $region15: #{_gcn_apply.4} parent=0 // pred_check_branch
    %359 = sbr.rel (0) target = $region17
  $region16: #{_gcn_apply.4} parent=0 // pred_region
    _
  $region17: #{_gcn_apply.4} parent=0 // pred_fallthru
    _

// kernel: _gcn_apply.7
$region0: #{_gcn_apply.7}
  #allocation0 [shape = 'u32[]', space=smem, size = 0x4, offset = 0x4, fixed_abs, tag = 'smem constant byte address 0x4 - core index']
  #allocation1 [shape = 'u32[72,128]{1,0:T(1,128)}', space=vmem, size = 0x9000, scoped, tag = 'internal scratch']
  #allocation2 [shape = 'f32[256,128]{1,0:T(8,128)}', space=vmem, size = 0x20000, scoped, tag = 'scratch operand']
  %s0 = inlined_call_operand.vmem [shape: bf16[256,256], index: 0, kind: input, shape index: {}]
  %s1 = inlined_call_operand.vmem [shape: bf16[256,128], index: 1, kind: input, shape index: {}]
  %s2 = inlined_call_operand.vmem [shape: f32[1,128], index: 2, kind: input, shape index: {}]
  %s3 = inlined_call_operand.vmem [shape: f32[256,128], index: 3, kind: output, shape index: {}]
  %s4 = sld [smem:[#allocation0]]
  $region30: #{_gcn_apply.7} parent=0
    _
  %s6 = ssub.s32 1, %s4
  %s7 = scalar_select 0, %s6, %s4
  // Predicated region
  $region2: #{_gcn_apply.7} parent=0 // pred_check
    _
  $region3: #{_gcn_apply.7} parent=0 // pred_check_branch
    %9 = sbr.rel (0) target = $region5
  $region4: #{_gcn_apply.7} parent=0 // pred_region
    _
  $region5: #{_gcn_apply.7} parent=0 // pred_fallthru
    _
  // Predicated region
  $region6: #{_gcn_apply.7} parent=0 // pred_check
    _
  $region7: #{_gcn_apply.7} parent=0 // pred_check_branch
    %11 = sbr.rel (0) target = $region9
  $region8: #{_gcn_apply.7} parent=0 // pred_region
    _
  $region9: #{_gcn_apply.7} parent=0 // pred_fallthru
    _
  // Predicated region
  $region10: #{_gcn_apply.7} parent=0 // pred_check
    _
  $region11: #{_gcn_apply.7} parent=0 // pred_check_branch
    %13 = sbr.rel (0) target = $region13
  $region12: #{_gcn_apply.7} parent=0 // pred_region
    _
  $region13: #{_gcn_apply.7} parent=0 // pred_fallthru
    _
  %p14 = scmp.eq.s32.totalorder 0, 0
  // Predicated region
  $region14: #{_gcn_apply.7} parent=0 // pred_check
    %p15 = pneg %p14
  $region15: #{_gcn_apply.7} parent=0 // pred_check_branch
    %17 = sbr.rel (%p15) target = $region17
  $region16: #{_gcn_apply.7} parent=0 // pred_region
    %18 = vst [vmem:[#allocation2] sm:$0xff] 0.0
    %19 = vst [vmem:[#allocation2 + $0x8] sm:$0xff] 0.0
    %20 = vst [vmem:[#allocation2 + $0x10] sm:$0xff] 0.0
    %21 = vst [vmem:[#allocation2 + $0x18] sm:$0xff] 0.0
    %22 = vst [vmem:[#allocation2 + $0x20] sm:$0xff] 0.0
    %23 = vst [vmem:[#allocation2 + $0x28] sm:$0xff] 0.0
    %24 = vst [vmem:[#allocation2 + $0x30] sm:$0xff] 0.0
    %25 = vst [vmem:[#allocation2 + $0x38] sm:$0xff] 0.0
    %26 = vst [vmem:[#allocation2 + $0x40] sm:$0xff] 0.0
    %27 = vst [vmem:[#allocation2 + $0x48] sm:$0xff] 0.0
    %28 = vst [vmem:[#allocation2 + $0x50] sm:$0xff] 0.0
    %29 = vst [vmem:[#allocation2 + $0x58] sm:$0xff] 0.0
    %30 = vst [vmem:[#allocation2 + $0x60] sm:$0xff] 0.0
    %31 = vst [vmem:[#allocation2 + $0x68] sm:$0xff] 0.0
    %32 = vst [vmem:[#allocation2 + $0x70] sm:$0xff] 0.0
    %33 = vst [vmem:[#allocation2 + $0x78] sm:$0xff] 0.0
    %34 = vst [vmem:[#allocation2 + $0x80] sm:$0xff] 0.0
    %35 = vst [vmem:[#allocation2 + $0x88] sm:$0xff] 0.0
    %36 = vst [vmem:[#allocation2 + $0x90] sm:$0xff] 0.0
    %37 = vst [vmem:[#allocation2 + $0x98] sm:$0xff] 0.0
    %38 = vst [vmem:[#allocation2 + $0xa0] sm:$0xff] 0.0
    %39 = vst [vmem:[#allocation2 + $0xa8] sm:$0xff] 0.0
    %40 = vst [vmem:[#allocation2 + $0xb0] sm:$0xff] 0.0
    %41 = vst [vmem:[#allocation2 + $0xb8] sm:$0xff] 0.0
    %42 = vst [vmem:[#allocation2 + $0xc0] sm:$0xff] 0.0
    %43 = vst [vmem:[#allocation2 + $0xc8] sm:$0xff] 0.0
    %44 = vst [vmem:[#allocation2 + $0xd0] sm:$0xff] 0.0
    %45 = vst [vmem:[#allocation2 + $0xd8] sm:$0xff] 0.0
    %46 = vst [vmem:[#allocation2 + $0xe0] sm:$0xff] 0.0
    %47 = vst [vmem:[#allocation2 + $0xe8] sm:$0xff] 0.0
    %48 = vst [vmem:[#allocation2 + $0xf0] sm:$0xff] 0.0
    %49 = vst [vmem:[#allocation2 + $0xf8] sm:$0xff] 0.0
  $region17: #{_gcn_apply.7} parent=0 // pred_fallthru
    _
  %v50 = vld [vmem:[#allocation2] sm:$0xff]
  %v51 = vld [vmem:[#allocation2 + $0x8] sm:$0xff]
  %v52 = vld [vmem:[#allocation2 + $0x10] sm:$0xff]
  %v53 = vld [vmem:[#allocation2 + $0x18] sm:$0xff]
  %v54 = vld [vmem:[#allocation2 + $0x20] sm:$0xff]
  %v55 = vld [vmem:[#allocation2 + $0x28] sm:$0xff]
  %v56 = vld [vmem:[#allocation2 + $0x30] sm:$0xff]
  %v57 = vld [vmem:[#allocation2 + $0x38] sm:$0xff]
  %v58 = vld [vmem:[#allocation2 + $0x40] sm:$0xff]
  %v59 = vld [vmem:[#allocation2 + $0x48] sm:$0xff]
  %v60 = vld [vmem:[#allocation2 + $0x50] sm:$0xff]
  %v61 = vld [vmem:[#allocation2 + $0x58] sm:$0xff]
  %v62 = vld [vmem:[#allocation2 + $0x60] sm:$0xff]
  %v63 = vld [vmem:[#allocation2 + $0x68] sm:$0xff]
  %v64 = vld [vmem:[#allocation2 + $0x70] sm:$0xff]
  %v65 = vld [vmem:[#allocation2 + $0x78] sm:$0xff]
  %v66 = vld [vmem:[#allocation2 + $0x80] sm:$0xff]
  %v67 = vld [vmem:[#allocation2 + $0x88] sm:$0xff]
  %v68 = vld [vmem:[#allocation2 + $0x90] sm:$0xff]
  %v69 = vld [vmem:[#allocation2 + $0x98] sm:$0xff]
  %v70 = vld [vmem:[#allocation2 + $0xa0] sm:$0xff]
  %v71 = vld [vmem:[#allocation2 + $0xa8] sm:$0xff]
  %v72 = vld [vmem:[#allocation2 + $0xb0] sm:$0xff]
  %v73 = vld [vmem:[#allocation2 + $0xb8] sm:$0xff]
  %v74 = vld [vmem:[#allocation2 + $0xc0] sm:$0xff]
  %v75 = vld [vmem:[#allocation2 + $0xc8] sm:$0xff]
  %v76 = vld [vmem:[#allocation2 + $0xd0] sm:$0xff]
  %v77 = vld [vmem:[#allocation2 + $0xd8] sm:$0xff]
  %v78 = vld [vmem:[#allocation2 + $0xe0] sm:$0xff]
  %v79 = vld [vmem:[#allocation2 + $0xe8] sm:$0xff]
  %v80 = vld [vmem:[#allocation2 + $0xf0] sm:$0xff]
  %v81 = vld [vmem:[#allocation2 + $0xf8] sm:$0xff]
  %v82 = vld [vmem:[%s0] sm:$0xff]
  %v83 = vld [vmem:[%s0 + $0x8] sm:$0xff]
  %v84 = vld [vmem:[%s0 + $0x10] sm:$0xff]
  %v85 = vld [vmem:[%s0 + $0x18] sm:$0xff]
  %v86 = vld [vmem:[%s0 + $0x20] sm:$0xff]
  %v87 = vld [vmem:[%s0 + $0x28] sm:$0xff]
  %v88 = vld [vmem:[%s0 + $0x30] sm:$0xff]
  %v89 = vld [vmem:[%s0 + $0x38] sm:$0xff]
  %v90 = vld [vmem:[%s0 + $0x40] sm:$0xff]
  %v91 = vld [vmem:[%s0 + $0x48] sm:$0xff]
  %v92 = vld [vmem:[%s0 + $0x50] sm:$0xff]
  %v93 = vld [vmem:[%s0 + $0x58] sm:$0xff]
  %v94 = vld [vmem:[%s0 + $0x60] sm:$0xff]
  %v95 = vld [vmem:[%s0 + $0x68] sm:$0xff]
  %v96 = vld [vmem:[%s0 + $0x70] sm:$0xff]
  %v97 = vld [vmem:[%s0 + $0x78] sm:$0xff]
  %v98 = vld [vmem:[%s0 + $0x80] sm:$0xff]
  %v99 = vld [vmem:[%s0 + $0x88] sm:$0xff]
  %v100 = vld [vmem:[%s0 + $0x90] sm:$0xff]
  %v101 = vld [vmem:[%s0 + $0x98] sm:$0xff]
  %v102 = vld [vmem:[%s0 + $0xa0] sm:$0xff]
  %v103 = vld [vmem:[%s0 + $0xa8] sm:$0xff]
  %v104 = vld [vmem:[%s0 + $0xb0] sm:$0xff]
  %v105 = vld [vmem:[%s0 + $0xb8] sm:$0xff]
  %v106 = vld [vmem:[%s0 + $0xc0] sm:$0xff]
  %v107 = vld [vmem:[%s0 + $0xc8] sm:$0xff]
  %v108 = vld [vmem:[%s0 + $0xd0] sm:$0xff]
  %v109 = vld [vmem:[%s0 + $0xd8] sm:$0xff]
  %v110 = vld [vmem:[%s0 + $0xe0] sm:$0xff]
  %v111 = vld [vmem:[%s0 + $0xe8] sm:$0xff]
  %v112 = vld [vmem:[%s0 + $0xf0] sm:$0xff]
  %v113 = vld [vmem:[%s0 + $0xf8] sm:$0xff]
  %v114 = vld [vmem:[%s1] sm:$0xf]
  %v115 = vld [vmem:[%s1 + $0x4] sm:$0xf]
  %v116 = vld [vmem:[%s1 + $0x8] sm:$0xf]
  %v117 = vld [vmem:[%s1 + $0xc] sm:$0xf]
  %v118 = vld [vmem:[%s1 + $0x10] sm:$0xf]
  %v119 = vld [vmem:[%s1 + $0x14] sm:$0xf]
  %v120 = vld [vmem:[%s1 + $0x18] sm:$0xf]
  %v121 = vld [vmem:[%s1 + $0x1c] sm:$0xf]
  %v122 = vld [vmem:[%s1 + $0x20] sm:$0xf]
  %v123 = vld [vmem:[%s1 + $0x24] sm:$0xf]
  %v124 = vld [vmem:[%s1 + $0x28] sm:$0xf]
  %v125 = vld [vmem:[%s1 + $0x2c] sm:$0xf]
  %v126 = vld [vmem:[%s1 + $0x30] sm:$0xf]
  %v127 = vld [vmem:[%s1 + $0x34] sm:$0xf]
  %v128 = vld [vmem:[%s1 + $0x38] sm:$0xf]
  %v129 = vld [vmem:[%s1 + $0x3c] sm:$0xf]
  %v130 = vld [vmem:[%s1 + $0x40] sm:$0xf]
  %v131 = vld [vmem:[%s1 + $0x44] sm:$0xf]
  %v132 = vld [vmem:[%s1 + $0x48] sm:$0xf]
  %v133 = vld [vmem:[%s1 + $0x4c] sm:$0xf]
  %v134 = vld [vmem:[%s1 + $0x50] sm:$0xf]
  %v135 = vld [vmem:[%s1 + $0x54] sm:$0xf]
  %v136 = vld [vmem:[%s1 + $0x58] sm:$0xf]
  %v137 = vld [vmem:[%s1 + $0x5c] sm:$0xf]
  %v138 = vld [vmem:[%s1 + $0x60] sm:$0xf]
  %v139 = vld [vmem:[%s1 + $0x64] sm:$0xf]
  %v140 = vld [vmem:[%s1 + $0x68] sm:$0xf]
  %v141 = vld [vmem:[%s1 + $0x6c] sm:$0xf]
  %v142 = vld [vmem:[%s1 + $0x70] sm:$0xf]
  %v143 = vld [vmem:[%s1 + $0x74] sm:$0xf]
  %v144 = vld [vmem:[%s1 + $0x78] sm:$0xf]
  %v145 = vld [vmem:[%s1 + $0x7c] sm:$0xf]
  %v178 = vunpack.c.l.b16 %v82
  %v179 = vunpack.c.h.b16 %v82
  %v180 = vunpack.c.l.b16 %v83
  %v181 = vunpack.c.h.b16 %v83
  %v182 = vunpack.c.l.b16 %v84
  %v183 = vunpack.c.h.b16 %v84
  %v184 = vunpack.c.l.b16 %v85
  %v185 = vunpack.c.h.b16 %v85
  %v186 = vunpack.c.l.b16 %v86
  %v187 = vunpack.c.h.b16 %v86
  %v188 = vunpack.c.l.b16 %v87
  %v189 = vunpack.c.h.b16 %v87
  %v190 = vunpack.c.l.b16 %v88
  %v191 = vunpack.c.h.b16 %v88
  %v192 = vunpack.c.l.b16 %v89
  %v193 = vunpack.c.h.b16 %v89
  %v194 = vunpack.c.l.b16 %v90
  %v195 = vunpack.c.h.b16 %v90
  %v196 = vunpack.c.l.b16 %v91
  %v197 = vunpack.c.h.b16 %v91
  %v198 = vunpack.c.l.b16 %v92
  %v199 = vunpack.c.h.b16 %v92
  %v200 = vunpack.c.l.b16 %v93
  %v201 = vunpack.c.h.b16 %v93
  %v202 = vunpack.c.l.b16 %v94
  %v203 = vunpack.c.h.b16 %v94
  %v204 = vunpack.c.l.b16 %v95
  %v205 = vunpack.c.h.b16 %v95
  %v206 = vunpack.c.l.b16 %v96
  %v207 = vunpack.c.h.b16 %v96
  %v208 = vunpack.c.l.b16 %v97
  %v209 = vunpack.c.h.b16 %v97
  %v210 = vunpack.c.l.b16 %v98
  %v211 = vunpack.c.h.b16 %v98
  %v212 = vunpack.c.l.b16 %v99
  %v213 = vunpack.c.h.b16 %v99
  %v214 = vunpack.c.l.b16 %v100
  %v215 = vunpack.c.h.b16 %v100
  %v216 = vunpack.c.l.b16 %v101
  %v217 = vunpack.c.h.b16 %v101
  %v218 = vunpack.c.l.b16 %v102
  %v219 = vunpack.c.h.b16 %v102
  %v220 = vunpack.c.l.b16 %v103
  %v221 = vunpack.c.h.b16 %v103
  %v222 = vunpack.c.l.b16 %v104
  %v223 = vunpack.c.h.b16 %v104
  %v224 = vunpack.c.l.b16 %v105
  %v225 = vunpack.c.h.b16 %v105
  %v226 = vunpack.c.l.b16 %v106
  %v227 = vunpack.c.h.b16 %v106
  %v228 = vunpack.c.l.b16 %v107
  %v229 = vunpack.c.h.b16 %v107
  %v230 = vunpack.c.l.b16 %v108
  %v231 = vunpack.c.h.b16 %v108
  %v232 = vunpack.c.l.b16 %v109
  %v233 = vunpack.c.h.b16 %v109
  %v234 = vunpack.c.l.b16 %v110
  %v235 = vunpack.c.h.b16 %v110
  %v236 = vunpack.c.l.b16 %v111
  %v237 = vunpack.c.h.b16 %v111
  %v238 = vunpack.c.l.b16 %v112
  %v239 = vunpack.c.h.b16 %v112
  %v240 = vunpack.c.l.b16 %v113
  %v241 = vunpack.c.h.b16 %v113
  %v242 = vpack.c.b16 %v180, %v178
  %v243 = vpack.c.b16 %v181, %v179
  %v244 = vpack.c.b16 %v184, %v182
  %v245 = vpack.c.b16 %v185, %v183
  %v246 = vpack.c.b16 %v188, %v186
  %v247 = vpack.c.b16 %v189, %v187
  %v248 = vpack.c.b16 %v192, %v190
  %v249 = vpack.c.b16 %v193, %v191
  %v250 = vpack.c.b16 %v196, %v194
  %v251 = vpack.c.b16 %v197, %v195
  %v252 = vpack.c.b16 %v200, %v198
  %v253 = vpack.c.b16 %v201, %v199
  %v254 = vpack.c.b16 %v204, %v202
  %v255 = vpack.c.b16 %v205, %v203
  %v256 = vpack.c.b16 %v208, %v206
  %v257 = vpack.c.b16 %v209, %v207
  %v258 = vpack.c.b16 %v212, %v210
  %v259 = vpack.c.b16 %v213, %v211
  %v260 = vpack.c.b16 %v216, %v214
  %v261 = vpack.c.b16 %v217, %v215
  %v262 = vpack.c.b16 %v220, %v218
  %v263 = vpack.c.b16 %v221, %v219
  %v264 = vpack.c.b16 %v224, %v222
  %v265 = vpack.c.b16 %v225, %v223
  %v266 = vpack.c.b16 %v228, %v226
  %v267 = vpack.c.b16 %v229, %v227
  %v268 = vpack.c.b16 %v232, %v230
  %v269 = vpack.c.b16 %v233, %v231
  %v270 = vpack.c.b16 %v236, %v234
  %v271 = vpack.c.b16 %v237, %v235
  %v272 = vpack.c.b16 %v240, %v238
  %v273 = vpack.c.b16 %v241, %v239
  %v338 = vunpack.c.l.b16 %v114
  %v339 = vunpack.c.l.b16 %v115
  %v340 = vunpack.c.l.b16 %v116
  %v341 = vunpack.c.l.b16 %v117
  %v342 = vunpack.c.l.b16 %v118
  %v343 = vunpack.c.l.b16 %v119
  %v344 = vunpack.c.l.b16 %v120
  %v345 = vunpack.c.l.b16 %v121
  %v346 = vunpack.c.l.b16 %v122
  %v347 = vunpack.c.l.b16 %v123
  %v348 = vunpack.c.l.b16 %v124
  %v349 = vunpack.c.l.b16 %v125
  %v350 = vunpack.c.l.b16 %v126
  %v351 = vunpack.c.l.b16 %v127
  %v352 = vunpack.c.l.b16 %v128
  %v353 = vunpack.c.l.b16 %v129
  %v354 = vunpack.c.l.b16 %v130
  %v355 = vunpack.c.l.b16 %v131
  %v356 = vunpack.c.l.b16 %v132
  %v357 = vunpack.c.l.b16 %v133
  %v358 = vunpack.c.l.b16 %v134
  %v359 = vunpack.c.l.b16 %v135
  %v360 = vunpack.c.l.b16 %v136
  %v361 = vunpack.c.l.b16 %v137
  %v362 = vunpack.c.l.b16 %v138
  %v363 = vunpack.c.l.b16 %v139
  %v364 = vunpack.c.l.b16 %v140
  %v365 = vunpack.c.l.b16 %v141
  %v366 = vunpack.c.l.b16 %v142
  %v367 = vunpack.c.l.b16 %v143
  %v368 = vunpack.c.l.b16 %v144
  %v369 = vunpack.c.l.b16 %v145
  %v370 = vpack.c.b16 %v339, %v338
  %v371 = vpack.c.b16 %v341, %v340
  %v372 = vpack.c.b16 %v343, %v342
  %v373 = vpack.c.b16 %v345, %v344
  %v374 = vpack.c.b16 %v347, %v346
  %v375 = vpack.c.b16 %v349, %v348
  %v376 = vpack.c.b16 %v351, %v350
  %v377 = vpack.c.b16 %v353, %v352
  %v378 = vpack.c.b16 %v355, %v354
  %v379 = vpack.c.b16 %v357, %v356
  %v380 = vpack.c.b16 %v359, %v358
  %v381 = vpack.c.b16 %v361, %v360
  %v382 = vpack.c.b16 %v363, %v362
  %v383 = vpack.c.b16 %v365, %v364
  %v384 = vpack.c.b16 %v367, %v366
  %v385 = vpack.c.b16 %v369, %v368
  %402 = vmatpush.bf16.msra.mxu0 %v377
  %403 = vmatpush.bf16.msra.mxu0 %v376
  %404 = vmatpush.bf16.msra.mxu0 %v375
  %405 = vmatpush.bf16.msra.mxu0 %v374
  %406 = vmatpush.bf16.msra.mxu0 %v373
  %407 = vmatpush.bf16.msra.mxu0 %v372
  %408 = vmatpush.bf16.msra.mxu0 %v371
  %409 = vmatpush.bf16.msra.mxu0 %v370
  %410 = vmatmul.bf16.gmra.mxu0 %v242
  %v411 = vpop.f32.mrf.mxu0
  %v412 = vadd.f32 0.0, %v411
  %v413 = vpop.f32.mrf.mxu0
  %v414 = vadd.f32 0.0, %v413
  %415 = vmatmul.bf16.gmra.mxu0 %v244
  %v416 = vpop.f32.mrf.mxu0
  %v417 = vadd.f32 0.0, %v416
  %v418 = vpop.f32.mrf.mxu0
  %v419 = vadd.f32 0.0, %v418
  %420 = vmatmul.bf16.gmra.mxu0 %v246
  %v421 = vpop.f32.mrf.mxu0
  %v422 = vadd.f32 0.0, %v421
  %v423 = vpop.f32.mrf.mxu0
  %v424 = vadd.f32 0.0, %v423
  %425 = vmatmul.bf16.gmra.mxu0 %v248
  %v426 = vpop.f32.mrf.mxu0
  %v427 = vadd.f32 0.0, %v426
  %v428 = vpop.f32.mrf.mxu0
  %v429 = vadd.f32 0.0, %v428
  %430 = vmatmul.bf16.gmra.mxu0 %v250
  %v431 = vpop.f32.mrf.mxu0
  %v432 = vadd.f32 0.0, %v431
  %v433 = vpop.f32.mrf.mxu0
  %v434 = vadd.f32 0.0, %v433
  %435 = vmatmul.bf16.gmra.mxu0 %v252
  %v436 = vpop.f32.mrf.mxu0
  %v437 = vadd.f32 0.0, %v436
  %v438 = vpop.f32.mrf.mxu0
  %v439 = vadd.f32 0.0, %v438
  %440 = vmatmul.bf16.gmra.mxu0 %v254
  %v441 = vpop.f32.mrf.mxu0
  %v442 = vadd.f32 0.0, %v441
  %v443 = vpop.f32.mrf.mxu0
  %v444 = vadd.f32 0.0, %v443
  %445 = vmatmul.bf16.gmra.mxu0 %v256
  %v446 = vpop.f32.mrf.mxu0
  %v447 = vadd.f32 0.0, %v446
  %v448 = vpop.f32.mrf.mxu0
  %v449 = vadd.f32 0.0, %v448
  %450 = vmatmul.bf16.gmra.mxu0 %v258
  %v451 = vpop.f32.mrf.mxu0
  %v452 = vadd.f32 0.0, %v451
  %v453 = vpop.f32.mrf.mxu0
  %v454 = vadd.f32 0.0, %v453
  %455 = vmatmul.bf16.gmra.mxu0 %v260
  %v456 = vpop.f32.mrf.mxu0
  %v457 = vadd.f32 0.0, %v456
  %v458 = vpop.f32.mrf.mxu0
  %v459 = vadd.f32 0.0, %v458
  %460 = vmatmul.bf16.gmra.mxu0 %v262
  %v461 = vpop.f32.mrf.mxu0
  %v462 = vadd.f32 0.0, %v461
  %v463 = vpop.f32.mrf.mxu0
  %v464 = vadd.f32 0.0, %v463
  %465 = vmatmul.bf16.gmra.mxu0 %v264
  %v466 = vpop.f32.mrf.mxu0
  %v467 = vadd.f32 0.0, %v466
  %v468 = vpop.f32.mrf.mxu0
  %v469 = vadd.f32 0.0, %v468
  %470 = vmatmul.bf16.gmra.mxu0 %v266
  %v471 = vpop.f32.mrf.mxu0
  %v472 = vadd.f32 0.0, %v471
  %v473 = vpop.f32.mrf.mxu0
  %v474 = vadd.f32 0.0, %v473
  %475 = vmatmul.bf16.gmra.mxu0 %v268
  %v476 = vpop.f32.mrf.mxu0
  %v477 = vadd.f32 0.0, %v476
  %v478 = vpop.f32.mrf.mxu0
  %v479 = vadd.f32 0.0, %v478
  %480 = vmatmul.bf16.gmra.mxu0 %v270
  %v481 = vpop.f32.mrf.mxu0
  %v482 = vadd.f32 0.0, %v481
  %v483 = vpop.f32.mrf.mxu0
  %v484 = vadd.f32 0.0, %v483
  %485 = vmatmul.bf16.gmra.mxu0 %v272
  %v486 = vpop.f32.mrf.mxu0
  %v487 = vadd.f32 0.0, %v486
  %v488 = vpop.f32.mrf.mxu0
  %v489 = vadd.f32 0.0, %v488
  %490 = vdwg.mxu0
  %491 = vmatpush.bf16.msra.mxu0 %v385
  %492 = vmatpush.bf16.msra.mxu0 %v384
  %493 = vmatpush.bf16.msra.mxu0 %v383
  %494 = vmatpush.bf16.msra.mxu0 %v382
  %495 = vmatpush.bf16.msra.mxu0 %v381
  %496 = vmatpush.bf16.msra.mxu0 %v380
  %497 = vmatpush.bf16.msra.mxu0 %v379
  %498 = vmatpush.bf16.msra.mxu0 %v378
  %499 = vmatmul.bf16.gmra.mxu0 %v243
  %v500 = vpop.f32.mrf.mxu0
  %v501 = vadd.f32 %v412, %v500
  %v502 = vpop.f32.mrf.mxu0
  %v503 = vadd.f32 %v414, %v502
  %504 = vmatmul.bf16.gmra.mxu0 %v245
  %v505 = vpop.f32.mrf.mxu0
  %v506 = vadd.f32 %v417, %v505
  %v507 = vpop.f32.mrf.mxu0
  %v508 = vadd.f32 %v419, %v507
  %509 = vmatmul.bf16.gmra.mxu0 %v247
  %v510 = vpop.f32.mrf.mxu0
  %v511 = vadd.f32 %v422, %v510
  %v512 = vpop.f32.mrf.mxu0
  %v513 = vadd.f32 %v424, %v512
  %514 = vmatmul.bf16.gmra.mxu0 %v249
  %v515 = vpop.f32.mrf.mxu0
  %v516 = vadd.f32 %v427, %v515
  %v517 = vpop.f32.mrf.mxu0
  %v518 = vadd.f32 %v429, %v517
  %519 = vmatmul.bf16.gmra.mxu0 %v251
  %v520 = vpop.f32.mrf.mxu0
  %v521 = vadd.f32 %v432, %v520
  %v522 = vpop.f32.mrf.mxu0
  %v523 = vadd.f32 %v434, %v522
  %524 = vmatmul.bf16.gmra.mxu0 %v253
  %v525 = vpop.f32.mrf.mxu0
  %v526 = vadd.f32 %v437, %v525
  %v527 = vpop.f32.mrf.mxu0
  %v528 = vadd.f32 %v439, %v527
  %529 = vmatmul.bf16.gmra.mxu0 %v255
  %v530 = vpop.f32.mrf.mxu0
  %v531 = vadd.f32 %v442, %v530
  %v532 = vpop.f32.mrf.mxu0
  %v533 = vadd.f32 %v444, %v532
  %534 = vmatmul.bf16.gmra.mxu0 %v257
  %v535 = vpop.f32.mrf.mxu0
  %v536 = vadd.f32 %v447, %v535
  %v537 = vpop.f32.mrf.mxu0
  %v538 = vadd.f32 %v449, %v537
  %539 = vmatmul.bf16.gmra.mxu0 %v259
  %v540 = vpop.f32.mrf.mxu0
  %v541 = vadd.f32 %v452, %v540
  %v542 = vpop.f32.mrf.mxu0
  %v543 = vadd.f32 %v454, %v542
  %544 = vmatmul.bf16.gmra.mxu0 %v261
  %v545 = vpop.f32.mrf.mxu0
  %v546 = vadd.f32 %v457, %v545
  %v547 = vpop.f32.mrf.mxu0
  %v548 = vadd.f32 %v459, %v547
  %549 = vmatmul.bf16.gmra.mxu0 %v263
  %v550 = vpop.f32.mrf.mxu0
  %v551 = vadd.f32 %v462, %v550
  %v552 = vpop.f32.mrf.mxu0
  %v553 = vadd.f32 %v464, %v552
  %554 = vmatmul.bf16.gmra.mxu0 %v265
  %v555 = vpop.f32.mrf.mxu0
  %v556 = vadd.f32 %v467, %v555
  %v557 = vpop.f32.mrf.mxu0
  %v558 = vadd.f32 %v469, %v557
  %559 = vmatmul.bf16.gmra.mxu0 %v267
  %v560 = vpop.f32.mrf.mxu0
  %v561 = vadd.f32 %v472, %v560
  %v562 = vpop.f32.mrf.mxu0
  %v563 = vadd.f32 %v474, %v562
  %564 = vmatmul.bf16.gmra.mxu0 %v269
  %v565 = vpop.f32.mrf.mxu0
  %v566 = vadd.f32 %v477, %v565
  %v567 = vpop.f32.mrf.mxu0
  %v568 = vadd.f32 %v479, %v567
  %569 = vmatmul.bf16.gmra.mxu0 %v271
  %v570 = vpop.f32.mrf.mxu0
  %v571 = vadd.f32 %v482, %v570
  %v572 = vpop.f32.mrf.mxu0
  %v573 = vadd.f32 %v484, %v572
  %574 = vmatmul.bf16.gmra.mxu0 %v273
  %v575 = vpop.f32.mrf.mxu0
  %v576 = vadd.f32 %v487, %v575
  %v577 = vpop.f32.mrf.mxu0
  %v578 = vadd.f32 %v489, %v577
  %579 = vdwg.mxu0
  %v580 = vadd.f32 %v50, %v501
  %v581 = vadd.f32 %v51, %v503
  %v582 = vadd.f32 %v52, %v506
  %v583 = vadd.f32 %v53, %v508
  %v584 = vadd.f32 %v54, %v511
  %v585 = vadd.f32 %v55, %v513
  %v586 = vadd.f32 %v56, %v516
  %v587 = vadd.f32 %v57, %v518
  %v588 = vadd.f32 %v58, %v521
  %v589 = vadd.f32 %v59, %v523
  %v590 = vadd.f32 %v60, %v526
  %v591 = vadd.f32 %v61, %v528
  %v592 = vadd.f32 %v62, %v531
  %v593 = vadd.f32 %v63, %v533
  %v594 = vadd.f32 %v64, %v536
  %v595 = vadd.f32 %v65, %v538
  %v596 = vadd.f32 %v66, %v541
  %v597 = vadd.f32 %v67, %v543
  %v598 = vadd.f32 %v68, %v546
  %v599 = vadd.f32 %v69, %v548
  %v600 = vadd.f32 %v70, %v551
  %v601 = vadd.f32 %v71, %v553
  %v602 = vadd.f32 %v72, %v556
  %v603 = vadd.f32 %v73, %v558
  %v604 = vadd.f32 %v74, %v561
  %v605 = vadd.f32 %v75, %v563
  %v606 = vadd.f32 %v76, %v566
  %v607 = vadd.f32 %v77, %v568
  %v608 = vadd.f32 %v78, %v571
  %v609 = vadd.f32 %v79, %v573
  %v610 = vadd.f32 %v80, %v576
  %v611 = vadd.f32 %v81, %v578
  %612 = vst [vmem:[#allocation2] sm:$0xff] %v580
  %613 = vst [vmem:[#allocation2 + $0x8] sm:$0xff] %v581
  %614 = vst [vmem:[#allocation2 + $0x10] sm:$0xff] %v582
  %615 = vst [vmem:[#allocation2 + $0x18] sm:$0xff] %v583
  %616 = vst [vmem:[#allocation2 + $0x20] sm:$0xff] %v584
  %617 = vst [vmem:[#allocation2 + $0x28] sm:$0xff] %v585
  %618 = vst [vmem:[#allocation2 + $0x30] sm:$0xff] %v586
  %619 = vst [vmem:[#allocation2 + $0x38] sm:$0xff] %v587
  %620 = vst [vmem:[#allocation2 + $0x40] sm:$0xff] %v588
  %621 = vst [vmem:[#allocation2 + $0x48] sm:$0xff] %v589
  %622 = vst [vmem:[#allocation2 + $0x50] sm:$0xff] %v590
  %623 = vst [vmem:[#allocation2 + $0x58] sm:$0xff] %v591
  %624 = vst [vmem:[#allocation2 + $0x60] sm:$0xff] %v592
  %625 = vst [vmem:[#allocation2 + $0x68] sm:$0xff] %v593
  %626 = vst [vmem:[#allocation2 + $0x70] sm:$0xff] %v594
  %627 = vst [vmem:[#allocation2 + $0x78] sm:$0xff] %v595
  %628 = vst [vmem:[#allocation2 + $0x80] sm:$0xff] %v596
  %629 = vst [vmem:[#allocation2 + $0x88] sm:$0xff] %v597
  %630 = vst [vmem:[#allocation2 + $0x90] sm:$0xff] %v598
  %631 = vst [vmem:[#allocation2 + $0x98] sm:$0xff] %v599
  %632 = vst [vmem:[#allocation2 + $0xa0] sm:$0xff] %v600
  %633 = vst [vmem:[#allocation2 + $0xa8] sm:$0xff] %v601
  %634 = vst [vmem:[#allocation2 + $0xb0] sm:$0xff] %v602
  %635 = vst [vmem:[#allocation2 + $0xb8] sm:$0xff] %v603
  %636 = vst [vmem:[#allocation2 + $0xc0] sm:$0xff] %v604
  %637 = vst [vmem:[#allocation2 + $0xc8] sm:$0xff] %v605
  %638 = vst [vmem:[#allocation2 + $0xd0] sm:$0xff] %v606
  %639 = vst [vmem:[#allocation2 + $0xd8] sm:$0xff] %v607
  %640 = vst [vmem:[#allocation2 + $0xe0] sm:$0xff] %v608
  %641 = vst [vmem:[#allocation2 + $0xe8] sm:$0xff] %v609
  %642 = vst [vmem:[#allocation2 + $0xf0] sm:$0xff] %v610
  %643 = vst [vmem:[#allocation2 + $0xf8] sm:$0xff] %v611
  // Predicated region
  $region18: #{_gcn_apply.7} parent=0 // pred_check
    %p644 = pneg %p14
  $region19: #{_gcn_apply.7} parent=0 // pred_check_branch
    %646 = sbr.rel (%p644) target = $region21
  $region20: #{_gcn_apply.7} parent=0 // pred_region
    %v647 = vld [vmem:[#allocation2] sm:$0xff]
    %v648 = vld [vmem:[#allocation2 + $0x8] sm:$0xff]
    %v649 = vld [vmem:[#allocation2 + $0x10] sm:$0xff]
    %v650 = vld [vmem:[#allocation2 + $0x18] sm:$0xff]
    %v651 = vld [vmem:[#allocation2 + $0x20] sm:$0xff]
    %v652 = vld [vmem:[#allocation2 + $0x28] sm:$0xff]
    %v653 = vld [vmem:[#allocation2 + $0x30] sm:$0xff]
    %v654 = vld [vmem:[#allocation2 + $0x38] sm:$0xff]
    %v655 = vld [vmem:[#allocation2 + $0x40] sm:$0xff]
    %v656 = vld [vmem:[#allocation2 + $0x48] sm:$0xff]
    %v657 = vld [vmem:[#allocation2 + $0x50] sm:$0xff]
    %v658 = vld [vmem:[#allocation2 + $0x58] sm:$0xff]
    %v659 = vld [vmem:[#allocation2 + $0x60] sm:$0xff]
    %v660 = vld [vmem:[#allocation2 + $0x68] sm:$0xff]
    %v661 = vld [vmem:[#allocation2 + $0x70] sm:$0xff]
    %v662 = vld [vmem:[#allocation2 + $0x78] sm:$0xff]
    %v663 = vld [vmem:[#allocation2 + $0x80] sm:$0xff]
    %v664 = vld [vmem:[#allocation2 + $0x88] sm:$0xff]
    %v665 = vld [vmem:[#allocation2 + $0x90] sm:$0xff]
    %v666 = vld [vmem:[#allocation2 + $0x98] sm:$0xff]
    %v667 = vld [vmem:[#allocation2 + $0xa0] sm:$0xff]
    %v668 = vld [vmem:[#allocation2 + $0xa8] sm:$0xff]
    %v669 = vld [vmem:[#allocation2 + $0xb0] sm:$0xff]
    %v670 = vld [vmem:[#allocation2 + $0xb8] sm:$0xff]
    %v671 = vld [vmem:[#allocation2 + $0xc0] sm:$0xff]
    %v672 = vld [vmem:[#allocation2 + $0xc8] sm:$0xff]
    %v673 = vld [vmem:[#allocation2 + $0xd0] sm:$0xff]
    %v674 = vld [vmem:[#allocation2 + $0xd8] sm:$0xff]
    %v675 = vld [vmem:[#allocation2 + $0xe0] sm:$0xff]
    %v676 = vld [vmem:[#allocation2 + $0xe8] sm:$0xff]
    %v677 = vld [vmem:[#allocation2 + $0xf0] sm:$0xff]
    %v678 = vld [vmem:[#allocation2 + $0xf8] sm:$0xff]
    %v679 = vld [vmem:[%s2] sm:$0x1]
    %v681 = vperm.slane %v679, 0
    %v683 = vadd.f32 %v647, %v681
    %v684 = vadd.f32 %v648, %v681
    %v685 = vadd.f32 %v649, %v681
    %v686 = vadd.f32 %v650, %v681
    %v687 = vadd.f32 %v651, %v681
    %v688 = vadd.f32 %v652, %v681
    %v689 = vadd.f32 %v653, %v681
    %v690 = vadd.f32 %v654, %v681
    %v691 = vadd.f32 %v655, %v681
    %v692 = vadd.f32 %v656, %v681
    %v693 = vadd.f32 %v657, %v681
    %v694 = vadd.f32 %v658, %v681
    %v695 = vadd.f32 %v659, %v681
    %v696 = vadd.f32 %v660, %v681
    %v697 = vadd.f32 %v661, %v681
    %v698 = vadd.f32 %v662, %v681
    %v699 = vadd.f32 %v663, %v681
    %v700 = vadd.f32 %v664, %v681
    %v701 = vadd.f32 %v665, %v681
    %v702 = vadd.f32 %v666, %v681
    %v703 = vadd.f32 %v667, %v681
    %v704 = vadd.f32 %v668, %v681
    %v705 = vadd.f32 %v669, %v681
    %v706 = vadd.f32 %v670, %v681
    %v707 = vadd.f32 %v671, %v681
    %v708 = vadd.f32 %v672, %v681
    %v709 = vadd.f32 %v673, %v681
    %v710 = vadd.f32 %v674, %v681
    %v711 = vadd.f32 %v675, %v681
    %v712 = vadd.f32 %v676, %v681
    %v713 = vadd.f32 %v677, %v681
    %v714 = vadd.f32 %v678, %v681
    %715 = vst [vmem:[%s3] sm:$0xff] %v683
    %716 = vst [vmem:[%s3 + $0x8] sm:$0xff] %v684
    %717 = vst [vmem:[%s3 + $0x10] sm:$0xff] %v685
    %718 = vst [vmem:[%s3 + $0x18] sm:$0xff] %v686
    %719 = vst [vmem:[%s3 + $0x20] sm:$0xff] %v687
    %720 = vst [vmem:[%s3 + $0x28] sm:$0xff] %v688
    %721 = vst [vmem:[%s3 + $0x30] sm:$0xff] %v689
    %722 = vst [vmem:[%s3 + $0x38] sm:$0xff] %v690
    %723 = vst [vmem:[%s3 + $0x40] sm:$0xff] %v691
    %724 = vst [vmem:[%s3 + $0x48] sm:$0xff] %v692
    %725 = vst [vmem:[%s3 + $0x50] sm:$0xff] %v693
    %726 = vst [vmem:[%s3 + $0x58] sm:$0xff] %v694
    %727 = vst [vmem:[%s3 + $0x60] sm:$0xff] %v695
    %728 = vst [vmem:[%s3 + $0x68] sm:$0xff] %v696
    %729 = vst [vmem:[%s3 + $0x70] sm:$0xff] %v697
    %730 = vst [vmem:[%s3 + $0x78] sm:$0xff] %v698
    %731 = vst [vmem:[%s3 + $0x80] sm:$0xff] %v699
    %732 = vst [vmem:[%s3 + $0x88] sm:$0xff] %v700
    %733 = vst [vmem:[%s3 + $0x90] sm:$0xff] %v701
    %734 = vst [vmem:[%s3 + $0x98] sm:$0xff] %v702
    %735 = vst [vmem:[%s3 + $0xa0] sm:$0xff] %v703
    %736 = vst [vmem:[%s3 + $0xa8] sm:$0xff] %v704
    %737 = vst [vmem:[%s3 + $0xb0] sm:$0xff] %v705
    %738 = vst [vmem:[%s3 + $0xb8] sm:$0xff] %v706
    %739 = vst [vmem:[%s3 + $0xc0] sm:$0xff] %v707
    %740 = vst [vmem:[%s3 + $0xc8] sm:$0xff] %v708
    %741 = vst [vmem:[%s3 + $0xd0] sm:$0xff] %v709
    %742 = vst [vmem:[%s3 + $0xd8] sm:$0xff] %v710
    %743 = vst [vmem:[%s3 + $0xe0] sm:$0xff] %v711
    %744 = vst [vmem:[%s3 + $0xe8] sm:$0xff] %v712
    %745 = vst [vmem:[%s3 + $0xf0] sm:$0xff] %v713
    %746 = vst [vmem:[%s3 + $0xf8] sm:$0xff] %v714
  $region21: #{_gcn_apply.7} parent=0 // pred_fallthru
    _
  // Predicated region
  $region22: #{_gcn_apply.7} parent=0 // pred_check
    _
  $region23: #{_gcn_apply.7} parent=0 // pred_check_branch
    %748 = sbr.rel (0) target = $region25
  $region24: #{_gcn_apply.7} parent=0 // pred_region
    _
  $region25: #{_gcn_apply.7} parent=0 // pred_fallthru
    _
  // Predicated region
  $region26: #{_gcn_apply.7} parent=0 // pred_check
    _
  $region27: #{_gcn_apply.7} parent=0 // pred_check_branch
    %750 = sbr.rel (0) target = $region29
  $region28: #{_gcn_apply.7} parent=0 // pred_region
    _
  $region29: #{_gcn_apply.7} parent=0 // pred_fallthru
    _

// kernel: _gcn_apply.5
$region0: #{_gcn_apply.5}
  #allocation0 [shape = 'u32[]', space=smem, size = 0x4, offset = 0x4, fixed_abs, tag = 'smem constant byte address 0x4 - core index']
  #allocation1 [shape = 'u32[72,128]{1,0:T(1,128)}', space=vmem, size = 0x9000, scoped, tag = 'internal scratch']
  #allocation2 [shape = 'f32[256,128]{1,0:T(8,128)}', space=vmem, size = 0x20000, scoped, tag = 'scratch operand']
  %s0 = inlined_call_operand.vmem [shape: bf16[256,256], index: 0, kind: input, shape index: {}]
  %s1 = inlined_call_operand.vmem [shape: bf16[256,128], index: 1, kind: input, shape index: {}]
  %s2 = inlined_call_operand.vmem [shape: f32[1,128], index: 2, kind: input, shape index: {}]
  %s3 = inlined_call_operand.vmem [shape: bf16[256,128], index: 3, kind: output, shape index: {}]
  %s4 = sld [smem:[#allocation0]]
  $region30: #{_gcn_apply.5} parent=0
    _
  %s6 = ssub.s32 1, %s4
  %s7 = scalar_select 0, %s6, %s4
  // Predicated region
  $region2: #{_gcn_apply.5} parent=0 // pred_check
    _
  $region3: #{_gcn_apply.5} parent=0 // pred_check_branch
    %9 = sbr.rel (0) target = $region5
  $region4: #{_gcn_apply.5} parent=0 // pred_region
    _
  $region5: #{_gcn_apply.5} parent=0 // pred_fallthru
    _
  // Predicated region
  $region6: #{_gcn_apply.5} parent=0 // pred_check
    _
  $region7: #{_gcn_apply.5} parent=0 // pred_check_branch
    %11 = sbr.rel (0) target = $region9
  $region8: #{_gcn_apply.5} parent=0 // pred_region
    _
  $region9: #{_gcn_apply.5} parent=0 // pred_fallthru
    _
  // Predicated region
  $region10: #{_gcn_apply.5} parent=0 // pred_check
    _
  $region11: #{_gcn_apply.5} parent=0 // pred_check_branch
    %13 = sbr.rel (0) target = $region13
  $region12: #{_gcn_apply.5} parent=0 // pred_region
    _
  $region13: #{_gcn_apply.5} parent=0 // pred_fallthru
    _
  %p14 = scmp.eq.s32.totalorder 0, 0
  // Predicated region
  $region14: #{_gcn_apply.5} parent=0 // pred_check
    %p15 = pneg %p14
  $region15: #{_gcn_apply.5} parent=0 // pred_check_branch
    %17 = sbr.rel (%p15) target = $region17
  $region16: #{_gcn_apply.5} parent=0 // pred_region
    %18 = vst [vmem:[#allocation2] sm:$0xff] 0.0
    %19 = vst [vmem:[#allocation2 + $0x8] sm:$0xff] 0.0
    %20 = vst [vmem:[#allocation2 + $0x10] sm:$0xff] 0.0
    %21 = vst [vmem:[#allocation2 + $0x18] sm:$0xff] 0.0
    %22 = vst [vmem:[#allocation2 + $0x20] sm:$0xff] 0.0
    %23 = vst [vmem:[#allocation2 + $0x28] sm:$0xff] 0.0
    %24 = vst [vmem:[#allocation2 + $0x30] sm:$0xff] 0.0
    %25 = vst [vmem:[#allocation2 + $0x38] sm:$0xff] 0.0
    %26 = vst [vmem:[#allocation2 + $0x40] sm:$0xff] 0.0
    %27 = vst [vmem:[#allocation2 + $0x48] sm:$0xff] 0.0
    %28 = vst [vmem:[#allocation2 + $0x50] sm:$0xff] 0.0
    %29 = vst [vmem:[#allocation2 + $0x58] sm:$0xff] 0.0
    %30 = vst [vmem:[#allocation2 + $0x60] sm:$0xff] 0.0
    %31 = vst [vmem:[#allocation2 + $0x68] sm:$0xff] 0.0
    %32 = vst [vmem:[#allocation2 + $0x70] sm:$0xff] 0.0
    %33 = vst [vmem:[#allocation2 + $0x78] sm:$0xff] 0.0
    %34 = vst [vmem:[#allocation2 + $0x80] sm:$0xff] 0.0
    %35 = vst [vmem:[#allocation2 + $0x88] sm:$0xff] 0.0
    %36 = vst [vmem:[#allocation2 + $0x90] sm:$0xff] 0.0
    %37 = vst [vmem:[#allocation2 + $0x98] sm:$0xff] 0.0
    %38 = vst [vmem:[#allocation2 + $0xa0] sm:$0xff] 0.0
    %39 = vst [vmem:[#allocation2 + $0xa8] sm:$0xff] 0.0
    %40 = vst [vmem:[#allocation2 + $0xb0] sm:$0xff] 0.0
    %41 = vst [vmem:[#allocation2 + $0xb8] sm:$0xff] 0.0
    %42 = vst [vmem:[#allocation2 + $0xc0] sm:$0xff] 0.0
    %43 = vst [vmem:[#allocation2 + $0xc8] sm:$0xff] 0.0
    %44 = vst [vmem:[#allocation2 + $0xd0] sm:$0xff] 0.0
    %45 = vst [vmem:[#allocation2 + $0xd8] sm:$0xff] 0.0
    %46 = vst [vmem:[#allocation2 + $0xe0] sm:$0xff] 0.0
    %47 = vst [vmem:[#allocation2 + $0xe8] sm:$0xff] 0.0
    %48 = vst [vmem:[#allocation2 + $0xf0] sm:$0xff] 0.0
    %49 = vst [vmem:[#allocation2 + $0xf8] sm:$0xff] 0.0
  $region17: #{_gcn_apply.5} parent=0 // pred_fallthru
    _
  %v50 = vld [vmem:[#allocation2] sm:$0xff]
  %v51 = vld [vmem:[#allocation2 + $0x8] sm:$0xff]
  %v52 = vld [vmem:[#allocation2 + $0x10] sm:$0xff]
  %v53 = vld [vmem:[#allocation2 + $0x18] sm:$0xff]
  %v54 = vld [vmem:[#allocation2 + $0x20] sm:$0xff]
  %v55 = vld [vmem:[#allocation2 + $0x28] sm:$0xff]
  %v56 = vld [vmem:[#allocation2 + $0x30] sm:$0xff]
  %v57 = vld [vmem:[#allocation2 + $0x38] sm:$0xff]
  %v58 = vld [vmem:[#allocation2 + $0x40] sm:$0xff]
  %v59 = vld [vmem:[#allocation2 + $0x48] sm:$0xff]
  %v60 = vld [vmem:[#allocation2 + $0x50] sm:$0xff]
  %v61 = vld [vmem:[#allocation2 + $0x58] sm:$0xff]
  %v62 = vld [vmem:[#allocation2 + $0x60] sm:$0xff]
  %v63 = vld [vmem:[#allocation2 + $0x68] sm:$0xff]
  %v64 = vld [vmem:[#allocation2 + $0x70] sm:$0xff]
  %v65 = vld [vmem:[#allocation2 + $0x78] sm:$0xff]
  %v66 = vld [vmem:[#allocation2 + $0x80] sm:$0xff]
  %v67 = vld [vmem:[#allocation2 + $0x88] sm:$0xff]
  %v68 = vld [vmem:[#allocation2 + $0x90] sm:$0xff]
  %v69 = vld [vmem:[#allocation2 + $0x98] sm:$0xff]
  %v70 = vld [vmem:[#allocation2 + $0xa0] sm:$0xff]
  %v71 = vld [vmem:[#allocation2 + $0xa8] sm:$0xff]
  %v72 = vld [vmem:[#allocation2 + $0xb0] sm:$0xff]
  %v73 = vld [vmem:[#allocation2 + $0xb8] sm:$0xff]
  %v74 = vld [vmem:[#allocation2 + $0xc0] sm:$0xff]
  %v75 = vld [vmem:[#allocation2 + $0xc8] sm:$0xff]
  %v76 = vld [vmem:[#allocation2 + $0xd0] sm:$0xff]
  %v77 = vld [vmem:[#allocation2 + $0xd8] sm:$0xff]
  %v78 = vld [vmem:[#allocation2 + $0xe0] sm:$0xff]
  %v79 = vld [vmem:[#allocation2 + $0xe8] sm:$0xff]
  %v80 = vld [vmem:[#allocation2 + $0xf0] sm:$0xff]
  %v81 = vld [vmem:[#allocation2 + $0xf8] sm:$0xff]
  %v82 = vld [vmem:[%s0] sm:$0xff]
  %v83 = vld [vmem:[%s0 + $0x8] sm:$0xff]
  %v84 = vld [vmem:[%s0 + $0x10] sm:$0xff]
  %v85 = vld [vmem:[%s0 + $0x18] sm:$0xff]
  %v86 = vld [vmem:[%s0 + $0x20] sm:$0xff]
  %v87 = vld [vmem:[%s0 + $0x28] sm:$0xff]
  %v88 = vld [vmem:[%s0 + $0x30] sm:$0xff]
  %v89 = vld [vmem:[%s0 + $0x38] sm:$0xff]
  %v90 = vld [vmem:[%s0 + $0x40] sm:$0xff]
  %v91 = vld [vmem:[%s0 + $0x48] sm:$0xff]
  %v92 = vld [vmem:[%s0 + $0x50] sm:$0xff]
  %v93 = vld [vmem:[%s0 + $0x58] sm:$0xff]
  %v94 = vld [vmem:[%s0 + $0x60] sm:$0xff]
  %v95 = vld [vmem:[%s0 + $0x68] sm:$0xff]
  %v96 = vld [vmem:[%s0 + $0x70] sm:$0xff]
  %v97 = vld [vmem:[%s0 + $0x78] sm:$0xff]
  %v98 = vld [vmem:[%s0 + $0x80] sm:$0xff]
  %v99 = vld [vmem:[%s0 + $0x88] sm:$0xff]
  %v100 = vld [vmem:[%s0 + $0x90] sm:$0xff]
  %v101 = vld [vmem:[%s0 + $0x98] sm:$0xff]
  %v102 = vld [vmem:[%s0 + $0xa0] sm:$0xff]
  %v103 = vld [vmem:[%s0 + $0xa8] sm:$0xff]
  %v104 = vld [vmem:[%s0 + $0xb0] sm:$0xff]
  %v105 = vld [vmem:[%s0 + $0xb8] sm:$0xff]
  %v106 = vld [vmem:[%s0 + $0xc0] sm:$0xff]
  %v107 = vld [vmem:[%s0 + $0xc8] sm:$0xff]
  %v108 = vld [vmem:[%s0 + $0xd0] sm:$0xff]
  %v109 = vld [vmem:[%s0 + $0xd8] sm:$0xff]
  %v110 = vld [vmem:[%s0 + $0xe0] sm:$0xff]
  %v111 = vld [vmem:[%s0 + $0xe8] sm:$0xff]
  %v112 = vld [vmem:[%s0 + $0xf0] sm:$0xff]
  %v113 = vld [vmem:[%s0 + $0xf8] sm:$0xff]
  %v114 = vld [vmem:[%s1] sm:$0xf]
  %v115 = vld [vmem:[%s1 + $0x4] sm:$0xf]
  %v116 = vld [vmem:[%s1 + $0x8] sm:$0xf]
  %v117 = vld [vmem:[%s1 + $0xc] sm:$0xf]
  %v118 = vld [vmem:[%s1 + $0x10] sm:$0xf]
  %v119 = vld [vmem:[%s1 + $0x14] sm:$0xf]
  %v120 = vld [vmem:[%s1 + $0x18] sm:$0xf]
  %v121 = vld [vmem:[%s1 + $0x1c] sm:$0xf]
  %v122 = vld [vmem:[%s1 + $0x20] sm:$0xf]
  %v123 = vld [vmem:[%s1 + $0x24] sm:$0xf]
  %v124 = vld [vmem:[%s1 + $0x28] sm:$0xf]
  %v125 = vld [vmem:[%s1 + $0x2c] sm:$0xf]
  %v126 = vld [vmem:[%s1 + $0x30] sm:$0xf]
  %v127 = vld [vmem:[%s1 + $0x34] sm:$0xf]
  %v128 = vld [vmem:[%s1 + $0x38] sm:$0xf]
  %v129 = vld [vmem:[%s1 + $0x3c] sm:$0xf]
  %v130 = vld [vmem:[%s1 + $0x40] sm:$0xf]
  %v131 = vld [vmem:[%s1 + $0x44] sm:$0xf]
  %v132 = vld [vmem:[%s1 + $0x48] sm:$0xf]
  %v133 = vld [vmem:[%s1 + $0x4c] sm:$0xf]
  %v134 = vld [vmem:[%s1 + $0x50] sm:$0xf]
  %v135 = vld [vmem:[%s1 + $0x54] sm:$0xf]
  %v136 = vld [vmem:[%s1 + $0x58] sm:$0xf]
  %v137 = vld [vmem:[%s1 + $0x5c] sm:$0xf]
  %v138 = vld [vmem:[%s1 + $0x60] sm:$0xf]
  %v139 = vld [vmem:[%s1 + $0x64] sm:$0xf]
  %v140 = vld [vmem:[%s1 + $0x68] sm:$0xf]
  %v141 = vld [vmem:[%s1 + $0x6c] sm:$0xf]
  %v142 = vld [vmem:[%s1 + $0x70] sm:$0xf]
  %v143 = vld [vmem:[%s1 + $0x74] sm:$0xf]
  %v144 = vld [vmem:[%s1 + $0x78] sm:$0xf]
  %v145 = vld [vmem:[%s1 + $0x7c] sm:$0xf]
  %v178 = vunpack.c.l.b16 %v82
  %v179 = vunpack.c.h.b16 %v82
  %v180 = vunpack.c.l.b16 %v83
  %v181 = vunpack.c.h.b16 %v83
  %v182 = vunpack.c.l.b16 %v84
  %v183 = vunpack.c.h.b16 %v84
  %v184 = vunpack.c.l.b16 %v85
  %v185 = vunpack.c.h.b16 %v85
  %v186 = vunpack.c.l.b16 %v86
  %v187 = vunpack.c.h.b16 %v86
  %v188 = vunpack.c.l.b16 %v87
  %v189 = vunpack.c.h.b16 %v87
  %v190 = vunpack.c.l.b16 %v88
  %v191 = vunpack.c.h.b16 %v88
  %v192 = vunpack.c.l.b16 %v89
  %v193 = vunpack.c.h.b16 %v89
  %v194 = vunpack.c.l.b16 %v90
  %v195 = vunpack.c.h.b16 %v90
  %v196 = vunpack.c.l.b16 %v91
  %v197 = vunpack.c.h.b16 %v91
  %v198 = vunpack.c.l.b16 %v92
  %v199 = vunpack.c.h.b16 %v92
  %v200 = vunpack.c.l.b16 %v93
  %v201 = vunpack.c.h.b16 %v93
  %v202 = vunpack.c.l.b16 %v94
  %v203 = vunpack.c.h.b16 %v94
  %v204 = vunpack.c.l.b16 %v95
  %v205 = vunpack.c.h.b16 %v95
  %v206 = vunpack.c.l.b16 %v96
  %v207 = vunpack.c.h.b16 %v96
  %v208 = vunpack.c.l.b16 %v97
  %v209 = vunpack.c.h.b16 %v97
  %v210 = vunpack.c.l.b16 %v98
  %v211 = vunpack.c.h.b16 %v98
  %v212 = vunpack.c.l.b16 %v99
  %v213 = vunpack.c.h.b16 %v99
  %v214 = vunpack.c.l.b16 %v100
  %v215 = vunpack.c.h.b16 %v100
  %v216 = vunpack.c.l.b16 %v101
  %v217 = vunpack.c.h.b16 %v101
  %v218 = vunpack.c.l.b16 %v102
  %v219 = vunpack.c.h.b16 %v102
  %v220 = vunpack.c.l.b16 %v103
  %v221 = vunpack.c.h.b16 %v103
  %v222 = vunpack.c.l.b16 %v104
  %v223 = vunpack.c.h.b16 %v104
  %v224 = vunpack.c.l.b16 %v105
  %v225 = vunpack.c.h.b16 %v105
  %v226 = vunpack.c.l.b16 %v106
  %v227 = vunpack.c.h.b16 %v106
  %v228 = vunpack.c.l.b16 %v107
  %v229 = vunpack.c.h.b16 %v107
  %v230 = vunpack.c.l.b16 %v108
  %v231 = vunpack.c.h.b16 %v108
  %v232 = vunpack.c.l.b16 %v109
  %v233 = vunpack.c.h.b16 %v109
  %v234 = vunpack.c.l.b16 %v110
  %v235 = vunpack.c.h.b16 %v110
  %v236 = vunpack.c.l.b16 %v111
  %v237 = vunpack.c.h.b16 %v111
  %v238 = vunpack.c.l.b16 %v112
  %v239 = vunpack.c.h.b16 %v112
  %v240 = vunpack.c.l.b16 %v113
  %v241 = vunpack.c.h.b16 %v113
  %v242 = vpack.c.b16 %v180, %v178
  %v243 = vpack.c.b16 %v181, %v179
  %v244 = vpack.c.b16 %v184, %v182
  %v245 = vpack.c.b16 %v185, %v183
  %v246 = vpack.c.b16 %v188, %v186
  %v247 = vpack.c.b16 %v189, %v187
  %v248 = vpack.c.b16 %v192, %v190
  %v249 = vpack.c.b16 %v193, %v191
  %v250 = vpack.c.b16 %v196, %v194
  %v251 = vpack.c.b16 %v197, %v195
  %v252 = vpack.c.b16 %v200, %v198
  %v253 = vpack.c.b16 %v201, %v199
  %v254 = vpack.c.b16 %v204, %v202
  %v255 = vpack.c.b16 %v205, %v203
  %v256 = vpack.c.b16 %v208, %v206
  %v257 = vpack.c.b16 %v209, %v207
  %v258 = vpack.c.b16 %v212, %v210
  %v259 = vpack.c.b16 %v213, %v211
  %v260 = vpack.c.b16 %v216, %v214
  %v261 = vpack.c.b16 %v217, %v215
  %v262 = vpack.c.b16 %v220, %v218
  %v263 = vpack.c.b16 %v221, %v219
  %v264 = vpack.c.b16 %v224, %v222
  %v265 = vpack.c.b16 %v225, %v223
  %v266 = vpack.c.b16 %v228, %v226
  %v267 = vpack.c.b16 %v229, %v227
  %v268 = vpack.c.b16 %v232, %v230
  %v269 = vpack.c.b16 %v233, %v231
  %v270 = vpack.c.b16 %v236, %v234
  %v271 = vpack.c.b16 %v237, %v235
  %v272 = vpack.c.b16 %v240, %v238
  %v273 = vpack.c.b16 %v241, %v239
  %v338 = vunpack.c.l.b16 %v114
  %v339 = vunpack.c.l.b16 %v115
  %v340 = vunpack.c.l.b16 %v116
  %v341 = vunpack.c.l.b16 %v117
  %v342 = vunpack.c.l.b16 %v118
  %v343 = vunpack.c.l.b16 %v119
  %v344 = vunpack.c.l.b16 %v120
  %v345 = vunpack.c.l.b16 %v121
  %v346 = vunpack.c.l.b16 %v122
  %v347 = vunpack.c.l.b16 %v123
  %v348 = vunpack.c.l.b16 %v124
  %v349 = vunpack.c.l.b16 %v125
  %v350 = vunpack.c.l.b16 %v126
  %v351 = vunpack.c.l.b16 %v127
  %v352 = vunpack.c.l.b16 %v128
  %v353 = vunpack.c.l.b16 %v129
  %v354 = vunpack.c.l.b16 %v130
  %v355 = vunpack.c.l.b16 %v131
  %v356 = vunpack.c.l.b16 %v132
  %v357 = vunpack.c.l.b16 %v133
  %v358 = vunpack.c.l.b16 %v134
  %v359 = vunpack.c.l.b16 %v135
  %v360 = vunpack.c.l.b16 %v136
  %v361 = vunpack.c.l.b16 %v137
  %v362 = vunpack.c.l.b16 %v138
  %v363 = vunpack.c.l.b16 %v139
  %v364 = vunpack.c.l.b16 %v140
  %v365 = vunpack.c.l.b16 %v141
  %v366 = vunpack.c.l.b16 %v142
  %v367 = vunpack.c.l.b16 %v143
  %v368 = vunpack.c.l.b16 %v144
  %v369 = vunpack.c.l.b16 %v145
  %v370 = vpack.c.b16 %v339, %v338
  %v371 = vpack.c.b16 %v341, %v340
  %v372 = vpack.c.b16 %v343, %v342
  %v373 = vpack.c.b16 %v345, %v344
  %v374 = vpack.c.b16 %v347, %v346
  %v375 = vpack.c.b16 %v349, %v348
  %v376 = vpack.c.b16 %v351, %v350
  %v377 = vpack.c.b16 %v353, %v352
  %v378 = vpack.c.b16 %v355, %v354
  %v379 = vpack.c.b16 %v357, %v356
  %v380 = vpack.c.b16 %v359, %v358
  %v381 = vpack.c.b16 %v361, %v360
  %v382 = vpack.c.b16 %v363, %v362
  %v383 = vpack.c.b16 %v365, %v364
  %v384 = vpack.c.b16 %v367, %v366
  %v385 = vpack.c.b16 %v369, %v368
  %402 = vmatpush.bf16.msra.mxu0 %v377
  %403 = vmatpush.bf16.msra.mxu0 %v376
  %404 = vmatpush.bf16.msra.mxu0 %v375
  %405 = vmatpush.bf16.msra.mxu0 %v374
  %406 = vmatpush.bf16.msra.mxu0 %v373
  %407 = vmatpush.bf16.msra.mxu0 %v372
  %408 = vmatpush.bf16.msra.mxu0 %v371
  %409 = vmatpush.bf16.msra.mxu0 %v370
  %410 = vmatmul.bf16.gmra.mxu0 %v242
  %v411 = vpop.f32.mrf.mxu0
  %v412 = vadd.f32 0.0, %v411
  %v413 = vpop.f32.mrf.mxu0
  %v414 = vadd.f32 0.0, %v413
  %415 = vmatmul.bf16.gmra.mxu0 %v244
  %v416 = vpop.f32.mrf.mxu0
  %v417 = vadd.f32 0.0, %v416
  %v418 = vpop.f32.mrf.mxu0
  %v419 = vadd.f32 0.0, %v418
  %420 = vmatmul.bf16.gmra.mxu0 %v246
  %v421 = vpop.f32.mrf.mxu0
  %v422 = vadd.f32 0.0, %v421
  %v423 = vpop.f32.mrf.mxu0
  %v424 = vadd.f32 0.0, %v423
  %425 = vmatmul.bf16.gmra.mxu0 %v248
  %v426 = vpop.f32.mrf.mxu0
  %v427 = vadd.f32 0.0, %v426
  %v428 = vpop.f32.mrf.mxu0
  %v429 = vadd.f32 0.0, %v428
  %430 = vmatmul.bf16.gmra.mxu0 %v250
  %v431 = vpop.f32.mrf.mxu0
  %v432 = vadd.f32 0.0, %v431
  %v433 = vpop.f32.mrf.mxu0
  %v434 = vadd.f32 0.0, %v433
  %435 = vmatmul.bf16.gmra.mxu0 %v252
  %v436 = vpop.f32.mrf.mxu0
  %v437 = vadd.f32 0.0, %v436
  %v438 = vpop.f32.mrf.mxu0
  %v439 = vadd.f32 0.0, %v438
  %440 = vmatmul.bf16.gmra.mxu0 %v254
  %v441 = vpop.f32.mrf.mxu0
  %v442 = vadd.f32 0.0, %v441
  %v443 = vpop.f32.mrf.mxu0
  %v444 = vadd.f32 0.0, %v443
  %445 = vmatmul.bf16.gmra.mxu0 %v256
  %v446 = vpop.f32.mrf.mxu0
  %v447 = vadd.f32 0.0, %v446
  %v448 = vpop.f32.mrf.mxu0
  %v449 = vadd.f32 0.0, %v448
  %450 = vmatmul.bf16.gmra.mxu0 %v258
  %v451 = vpop.f32.mrf.mxu0
  %v452 = vadd.f32 0.0, %v451
  %v453 = vpop.f32.mrf.mxu0
  %v454 = vadd.f32 0.0, %v453
  %455 = vmatmul.bf16.gmra.mxu0 %v260
  %v456 = vpop.f32.mrf.mxu0
  %v457 = vadd.f32 0.0, %v456
  %v458 = vpop.f32.mrf.mxu0
  %v459 = vadd.f32 0.0, %v458
  %460 = vmatmul.bf16.gmra.mxu0 %v262
  %v461 = vpop.f32.mrf.mxu0
  %v462 = vadd.f32 0.0, %v461
  %v463 = vpop.f32.mrf.mxu0
  %v464 = vadd.f32 0.0, %v463
  %465 = vmatmul.bf16.gmra.mxu0 %v264
  %v466 = vpop.f32.mrf.mxu0
  %v467 = vadd.f32 0.0, %v466
  %v468 = vpop.f32.mrf.mxu0
  %v469 = vadd.f32 0.0, %v468
  %470 = vmatmul.bf16.gmra.mxu0 %v266
  %v471 = vpop.f32.mrf.mxu0
  %v472 = vadd.f32 0.0, %v471
  %v473 = vpop.f32.mrf.mxu0
  %v474 = vadd.f32 0.0, %v473
  %475 = vmatmul.bf16.gmra.mxu0 %v268
  %v476 = vpop.f32.mrf.mxu0
  %v477 = vadd.f32 0.0, %v476
  %v478 = vpop.f32.mrf.mxu0
  %v479 = vadd.f32 0.0, %v478
  %480 = vmatmul.bf16.gmra.mxu0 %v270
  %v481 = vpop.f32.mrf.mxu0
  %v482 = vadd.f32 0.0, %v481
  %v483 = vpop.f32.mrf.mxu0
  %v484 = vadd.f32 0.0, %v483
  %485 = vmatmul.bf16.gmra.mxu0 %v272
  %v486 = vpop.f32.mrf.mxu0
  %v487 = vadd.f32 0.0, %v486
  %v488 = vpop.f32.mrf.mxu0
  %v489 = vadd.f32 0.0, %v488
  %490 = vdwg.mxu0
  %491 = vmatpush.bf16.msra.mxu0 %v385
  %492 = vmatpush.bf16.msra.mxu0 %v384
  %493 = vmatpush.bf16.msra.mxu0 %v383
  %494 = vmatpush.bf16.msra.mxu0 %v382
  %495 = vmatpush.bf16.msra.mxu0 %v381
  %496 = vmatpush.bf16.msra.mxu0 %v380
  %497 = vmatpush.bf16.msra.mxu0 %v379
  %498 = vmatpush.bf16.msra.mxu0 %v378
  %499 = vmatmul.bf16.gmra.mxu0 %v243
  %v500 = vpop.f32.mrf.mxu0
  %v501 = vadd.f32 %v412, %v500
  %v502 = vpop.f32.mrf.mxu0
  %v503 = vadd.f32 %v414, %v502
  %504 = vmatmul.bf16.gmra.mxu0 %v245
  %v505 = vpop.f32.mrf.mxu0
  %v506 = vadd.f32 %v417, %v505
  %v507 = vpop.f32.mrf.mxu0
  %v508 = vadd.f32 %v419, %v507
  %509 = vmatmul.bf16.gmra.mxu0 %v247
  %v510 = vpop.f32.mrf.mxu0
  %v511 = vadd.f32 %v422, %v510
  %v512 = vpop.f32.mrf.mxu0
  %v513 = vadd.f32 %v424, %v512
  %514 = vmatmul.bf16.gmra.mxu0 %v249
  %v515 = vpop.f32.mrf.mxu0
  %v516 = vadd.f32 %v427, %v515
  %v517 = vpop.f32.mrf.mxu0
  %v518 = vadd.f32 %v429, %v517
  %519 = vmatmul.bf16.gmra.mxu0 %v251
  %v520 = vpop.f32.mrf.mxu0
  %v521 = vadd.f32 %v432, %v520
  %v522 = vpop.f32.mrf.mxu0
  %v523 = vadd.f32 %v434, %v522
  %524 = vmatmul.bf16.gmra.mxu0 %v253
  %v525 = vpop.f32.mrf.mxu0
  %v526 = vadd.f32 %v437, %v525
  %v527 = vpop.f32.mrf.mxu0
  %v528 = vadd.f32 %v439, %v527
  %529 = vmatmul.bf16.gmra.mxu0 %v255
  %v530 = vpop.f32.mrf.mxu0
  %v531 = vadd.f32 %v442, %v530
  %v532 = vpop.f32.mrf.mxu0
  %v533 = vadd.f32 %v444, %v532
  %534 = vmatmul.bf16.gmra.mxu0 %v257
  %v535 = vpop.f32.mrf.mxu0
  %v536 = vadd.f32 %v447, %v535
  %v537 = vpop.f32.mrf.mxu0
  %v538 = vadd.f32 %v449, %v537
  %539 = vmatmul.bf16.gmra.mxu0 %v259
  %v540 = vpop.f32.mrf.mxu0
  %v541 = vadd.f32 %v452, %v540
  %v542 = vpop.f32.mrf.mxu0
  %v543 = vadd.f32 %v454, %v542
  %544 = vmatmul.bf16.gmra.mxu0 %v261
  %v545 = vpop.f32.mrf.mxu0
  %v546 = vadd.f32 %v457, %v545
  %v547 = vpop.f32.mrf.mxu0
  %v548 = vadd.f32 %v459, %v547
  %549 = vmatmul.bf16.gmra.mxu0 %v263
  %v550 = vpop.f32.mrf.mxu0
  %v551 = vadd.f32 %v462, %v550
  %v552 = vpop.f32.mrf.mxu0
  %v553 = vadd.f32 %v464, %v552
  %554 = vmatmul.bf16.gmra.mxu0 %v265
  %v555 = vpop.f32.mrf.mxu0
  %v556 = vadd.f32 %v467, %v555
  %v557 = vpop.f32.mrf.mxu0
  %v558 = vadd.f32 %v469, %v557
  %559 = vmatmul.bf16.gmra.mxu0 %v267
  %v560 = vpop.f32.mrf.mxu0
  %v561 = vadd.f32 %v472, %v560
  %v562 = vpop.f32.mrf.mxu0
  %v563 = vadd.f32 %v474, %v562
  %564 = vmatmul.bf16.gmra.mxu0 %v269
  %v565 = vpop.f32.mrf.mxu0
  %v566 = vadd.f32 %v477, %v565
  %v567 = vpop.f32.mrf.mxu0
  %v568 = vadd.f32 %v479, %v567
  %569 = vmatmul.bf16.gmra.mxu0 %v271
  %v570 = vpop.f32.mrf.mxu0
  %v571 = vadd.f32 %v482, %v570
  %v572 = vpop.f32.mrf.mxu0
  %v573 = vadd.f32 %v484, %v572
  %574 = vmatmul.bf16.gmra.mxu0 %v273
  %v575 = vpop.f32.mrf.mxu0
  %v576 = vadd.f32 %v487, %v575
  %v577 = vpop.f32.mrf.mxu0
  %v578 = vadd.f32 %v489, %v577
  %579 = vdwg.mxu0
  %v580 = vadd.f32 %v50, %v501
  %v581 = vadd.f32 %v51, %v503
  %v582 = vadd.f32 %v52, %v506
  %v583 = vadd.f32 %v53, %v508
  %v584 = vadd.f32 %v54, %v511
  %v585 = vadd.f32 %v55, %v513
  %v586 = vadd.f32 %v56, %v516
  %v587 = vadd.f32 %v57, %v518
  %v588 = vadd.f32 %v58, %v521
  %v589 = vadd.f32 %v59, %v523
  %v590 = vadd.f32 %v60, %v526
  %v591 = vadd.f32 %v61, %v528
  %v592 = vadd.f32 %v62, %v531
  %v593 = vadd.f32 %v63, %v533
  %v594 = vadd.f32 %v64, %v536
  %v595 = vadd.f32 %v65, %v538
  %v596 = vadd.f32 %v66, %v541
  %v597 = vadd.f32 %v67, %v543
  %v598 = vadd.f32 %v68, %v546
  %v599 = vadd.f32 %v69, %v548
  %v600 = vadd.f32 %v70, %v551
  %v601 = vadd.f32 %v71, %v553
  %v602 = vadd.f32 %v72, %v556
  %v603 = vadd.f32 %v73, %v558
  %v604 = vadd.f32 %v74, %v561
  %v605 = vadd.f32 %v75, %v563
  %v606 = vadd.f32 %v76, %v566
  %v607 = vadd.f32 %v77, %v568
  %v608 = vadd.f32 %v78, %v571
  %v609 = vadd.f32 %v79, %v573
  %v610 = vadd.f32 %v80, %v576
  %v611 = vadd.f32 %v81, %v578
  %612 = vst [vmem:[#allocation2] sm:$0xff] %v580
  %613 = vst [vmem:[#allocation2 + $0x8] sm:$0xff] %v581
  %614 = vst [vmem:[#allocation2 + $0x10] sm:$0xff] %v582
  %615 = vst [vmem:[#allocation2 + $0x18] sm:$0xff] %v583
  %616 = vst [vmem:[#allocation2 + $0x20] sm:$0xff] %v584
  %617 = vst [vmem:[#allocation2 + $0x28] sm:$0xff] %v585
  %618 = vst [vmem:[#allocation2 + $0x30] sm:$0xff] %v586
  %619 = vst [vmem:[#allocation2 + $0x38] sm:$0xff] %v587
  %620 = vst [vmem:[#allocation2 + $0x40] sm:$0xff] %v588
  %621 = vst [vmem:[#allocation2 + $0x48] sm:$0xff] %v589
  %622 = vst [vmem:[#allocation2 + $0x50] sm:$0xff] %v590
  %623 = vst [vmem:[#allocation2 + $0x58] sm:$0xff] %v591
  %624 = vst [vmem:[#allocation2 + $0x60] sm:$0xff] %v592
  %625 = vst [vmem:[#allocation2 + $0x68] sm:$0xff] %v593
  %626 = vst [vmem:[#allocation2 + $0x70] sm:$0xff] %v594
  %627 = vst [vmem:[#allocation2 + $0x78] sm:$0xff] %v595
  %628 = vst [vmem:[#allocation2 + $0x80] sm:$0xff] %v596
  %629 = vst [vmem:[#allocation2 + $0x88] sm:$0xff] %v597
  %630 = vst [vmem:[#allocation2 + $0x90] sm:$0xff] %v598
  %631 = vst [vmem:[#allocation2 + $0x98] sm:$0xff] %v599
  %632 = vst [vmem:[#allocation2 + $0xa0] sm:$0xff] %v600
  %633 = vst [vmem:[#allocation2 + $0xa8] sm:$0xff] %v601
  %634 = vst [vmem:[#allocation2 + $0xb0] sm:$0xff] %v602
  %635 = vst [vmem:[#allocation2 + $0xb8] sm:$0xff] %v603
  %636 = vst [vmem:[#allocation2 + $0xc0] sm:$0xff] %v604
  %637 = vst [vmem:[#allocation2 + $0xc8] sm:$0xff] %v605
  %638 = vst [vmem:[#allocation2 + $0xd0] sm:$0xff] %v606
  %639 = vst [vmem:[#allocation2 + $0xd8] sm:$0xff] %v607
  %640 = vst [vmem:[#allocation2 + $0xe0] sm:$0xff] %v608
  %641 = vst [vmem:[#allocation2 + $0xe8] sm:$0xff] %v609
  %642 = vst [vmem:[#allocation2 + $0xf0] sm:$0xff] %v610
  %643 = vst [vmem:[#allocation2 + $0xf8] sm:$0xff] %v611
  // Predicated region
  $region18: #{_gcn_apply.5} parent=0 // pred_check
    %p644 = pneg %p14
  $region19: #{_gcn_apply.5} parent=0 // pred_check_branch
    %646 = sbr.rel (%p644) target = $region21
  $region20: #{_gcn_apply.5} parent=0 // pred_region
    %v647 = vld [vmem:[#allocation2] sm:$0xff]
    %v648 = vld [vmem:[#allocation2 + $0x8] sm:$0xff]
    %v649 = vld [vmem:[#allocation2 + $0x10] sm:$0xff]
    %v650 = vld [vmem:[#allocation2 + $0x18] sm:$0xff]
    %v651 = vld [vmem:[#allocation2 + $0x20] sm:$0xff]
    %v652 = vld [vmem:[#allocation2 + $0x28] sm:$0xff]
    %v653 = vld [vmem:[#allocation2 + $0x30] sm:$0xff]
    %v654 = vld [vmem:[#allocation2 + $0x38] sm:$0xff]
    %v655 = vld [vmem:[#allocation2 + $0x40] sm:$0xff]
    %v656 = vld [vmem:[#allocation2 + $0x48] sm:$0xff]
    %v657 = vld [vmem:[#allocation2 + $0x50] sm:$0xff]
    %v658 = vld [vmem:[#allocation2 + $0x58] sm:$0xff]
    %v659 = vld [vmem:[#allocation2 + $0x60] sm:$0xff]
    %v660 = vld [vmem:[#allocation2 + $0x68] sm:$0xff]
    %v661 = vld [vmem:[#allocation2 + $0x70] sm:$0xff]
    %v662 = vld [vmem:[#allocation2 + $0x78] sm:$0xff]
    %v663 = vld [vmem:[#allocation2 + $0x80] sm:$0xff]
    %v664 = vld [vmem:[#allocation2 + $0x88] sm:$0xff]
    %v665 = vld [vmem:[#allocation2 + $0x90] sm:$0xff]
    %v666 = vld [vmem:[#allocation2 + $0x98] sm:$0xff]
    %v667 = vld [vmem:[#allocation2 + $0xa0] sm:$0xff]
    %v668 = vld [vmem:[#allocation2 + $0xa8] sm:$0xff]
    %v669 = vld [vmem:[#allocation2 + $0xb0] sm:$0xff]
    %v670 = vld [vmem:[#allocation2 + $0xb8] sm:$0xff]
    %v671 = vld [vmem:[#allocation2 + $0xc0] sm:$0xff]
    %v672 = vld [vmem:[#allocation2 + $0xc8] sm:$0xff]
    %v673 = vld [vmem:[#allocation2 + $0xd0] sm:$0xff]
    %v674 = vld [vmem:[#allocation2 + $0xd8] sm:$0xff]
    %v675 = vld [vmem:[#allocation2 + $0xe0] sm:$0xff]
    %v676 = vld [vmem:[#allocation2 + $0xe8] sm:$0xff]
    %v677 = vld [vmem:[#allocation2 + $0xf0] sm:$0xff]
    %v678 = vld [vmem:[#allocation2 + $0xf8] sm:$0xff]
    %v679 = vld [vmem:[%s2] sm:$0x1]
    %v681 = vperm.slane %v679, 0
    %v683 = vadd.f32 %v647, %v681
    %v684 = vadd.f32 %v648, %v681
    %v685 = vadd.f32 %v649, %v681
    %v686 = vadd.f32 %v650, %v681
    %v687 = vadd.f32 %v651, %v681
    %v688 = vadd.f32 %v652, %v681
    %v689 = vadd.f32 %v653, %v681
    %v690 = vadd.f32 %v654, %v681
    %v691 = vadd.f32 %v655, %v681
    %v692 = vadd.f32 %v656, %v681
    %v693 = vadd.f32 %v657, %v681
    %v694 = vadd.f32 %v658, %v681
    %v695 = vadd.f32 %v659, %v681
    %v696 = vadd.f32 %v660, %v681
    %v697 = vadd.f32 %v661, %v681
    %v698 = vadd.f32 %v662, %v681
    %v699 = vadd.f32 %v663, %v681
    %v700 = vadd.f32 %v664, %v681
    %v701 = vadd.f32 %v665, %v681
    %v702 = vadd.f32 %v666, %v681
    %v703 = vadd.f32 %v667, %v681
    %v704 = vadd.f32 %v668, %v681
    %v705 = vadd.f32 %v669, %v681
    %v706 = vadd.f32 %v670, %v681
    %v707 = vadd.f32 %v671, %v681
    %v708 = vadd.f32 %v672, %v681
    %v709 = vadd.f32 %v673, %v681
    %v710 = vadd.f32 %v674, %v681
    %v711 = vadd.f32 %v675, %v681
    %v712 = vadd.f32 %v676, %v681
    %v713 = vadd.f32 %v677, %v681
    %v714 = vadd.f32 %v678, %v681
    %v715 = vmax.f32 %v683, 0.0
    %v716 = vmax.f32 %v684, 0.0
    %v717 = vmax.f32 %v685, 0.0
    %v718 = vmax.f32 %v686, 0.0
    %v719 = vmax.f32 %v687, 0.0
    %v720 = vmax.f32 %v688, 0.0
    %v721 = vmax.f32 %v689, 0.0
    %v722 = vmax.f32 %v690, 0.0
    %v723 = vmax.f32 %v691, 0.0
    %v724 = vmax.f32 %v692, 0.0
    %v725 = vmax.f32 %v693, 0.0
    %v726 = vmax.f32 %v694, 0.0
    %v727 = vmax.f32 %v695, 0.0
    %v728 = vmax.f32 %v696, 0.0
    %v729 = vmax.f32 %v697, 0.0
    %v730 = vmax.f32 %v698, 0.0
    %v731 = vmax.f32 %v699, 0.0
    %v732 = vmax.f32 %v700, 0.0
    %v733 = vmax.f32 %v701, 0.0
    %v734 = vmax.f32 %v702, 0.0
    %v735 = vmax.f32 %v703, 0.0
    %v736 = vmax.f32 %v704, 0.0
    %v737 = vmax.f32 %v705, 0.0
    %v738 = vmax.f32 %v706, 0.0
    %v739 = vmax.f32 %v707, 0.0
    %v740 = vmax.f32 %v708, 0.0
    %v741 = vmax.f32 %v709, 0.0
    %v742 = vmax.f32 %v710, 0.0
    %v743 = vmax.f32 %v711, 0.0
    %v744 = vmax.f32 %v712, 0.0
    %v745 = vmax.f32 %v713, 0.0
    %v746 = vmax.f32 %v714, 0.0
    %v747 = vpack.c.bf16 %v715, %v715
    %v748 = vpack.c.bf16 %v716, %v716
    %v749 = vpack.c.bf16 %v717, %v717
    %v750 = vpack.c.bf16 %v718, %v718
    %v751 = vpack.c.bf16 %v719, %v719
    %v752 = vpack.c.bf16 %v720, %v720
    %v753 = vpack.c.bf16 %v721, %v721
    %v754 = vpack.c.bf16 %v722, %v722
    %v755 = vpack.c.bf16 %v723, %v723
    %v756 = vpack.c.bf16 %v724, %v724
    %v757 = vpack.c.bf16 %v725, %v725
    %v758 = vpack.c.bf16 %v726, %v726
    %v759 = vpack.c.bf16 %v727, %v727
    %v760 = vpack.c.bf16 %v728, %v728
    %v761 = vpack.c.bf16 %v729, %v729
    %v762 = vpack.c.bf16 %v730, %v730
    %v763 = vpack.c.bf16 %v731, %v731
    %v764 = vpack.c.bf16 %v732, %v732
    %v765 = vpack.c.bf16 %v733, %v733
    %v766 = vpack.c.bf16 %v734, %v734
    %v767 = vpack.c.bf16 %v735, %v735
    %v768 = vpack.c.bf16 %v736, %v736
    %v769 = vpack.c.bf16 %v737, %v737
    %v770 = vpack.c.bf16 %v738, %v738
    %v771 = vpack.c.bf16 %v739, %v739
    %v772 = vpack.c.bf16 %v740, %v740
    %v773 = vpack.c.bf16 %v741, %v741
    %v774 = vpack.c.bf16 %v742, %v742
    %v775 = vpack.c.bf16 %v743, %v743
    %v776 = vpack.c.bf16 %v744, %v744
    %v777 = vpack.c.bf16 %v745, %v745
    %v778 = vpack.c.bf16 %v746, %v746
    %779 = vst [vmem:[%s3] sm:$0xf] %v747
    %780 = vst [vmem:[%s3 + $0x4] sm:$0xf] %v748
    %781 = vst [vmem:[%s3 + $0x8] sm:$0xf] %v749
    %782 = vst [vmem:[%s3 + $0xc] sm:$0xf] %v750
    %783 = vst [vmem:[%s3 + $0x10] sm:$0xf] %v751
    %784 = vst [vmem:[%s3 + $0x14] sm:$0xf] %v752
    %785 = vst [vmem:[%s3 + $0x18] sm:$0xf] %v753
    %786 = vst [vmem:[%s3 + $0x1c] sm:$0xf] %v754
    %787 = vst [vmem:[%s3 + $0x20] sm:$0xf] %v755
    %788 = vst [vmem:[%s3 + $0x24] sm:$0xf] %v756
    %789 = vst [vmem:[%s3 + $0x28] sm:$0xf] %v757
    %790 = vst [vmem:[%s3 + $0x2c] sm:$0xf] %v758
    %791 = vst [vmem:[%s3 + $0x30] sm:$0xf] %v759
    %792 = vst [vmem:[%s3 + $0x34] sm:$0xf] %v760
    %793 = vst [vmem:[%s3 + $0x38] sm:$0xf] %v761
    %794 = vst [vmem:[%s3 + $0x3c] sm:$0xf] %v762
    %795 = vst [vmem:[%s3 + $0x40] sm:$0xf] %v763
    %796 = vst [vmem:[%s3 + $0x44] sm:$0xf] %v764
    %797 = vst [vmem:[%s3 + $0x48] sm:$0xf] %v765
    %798 = vst [vmem:[%s3 + $0x4c] sm:$0xf] %v766
    %799 = vst [vmem:[%s3 + $0x50] sm:$0xf] %v767
    %800 = vst [vmem:[%s3 + $0x54] sm:$0xf] %v768
    %801 = vst [vmem:[%s3 + $0x58] sm:$0xf] %v769
    %802 = vst [vmem:[%s3 + $0x5c] sm:$0xf] %v770
    %803 = vst [vmem:[%s3 + $0x60] sm:$0xf] %v771
    %804 = vst [vmem:[%s3 + $0x64] sm:$0xf] %v772
    %805 = vst [vmem:[%s3 + $0x68] sm:$0xf] %v773
    %806 = vst [vmem:[%s3 + $0x6c] sm:$0xf] %v774
    %807 = vst [vmem:[%s3 + $0x70] sm:$0xf] %v775
    %808 = vst [vmem:[%s3 + $0x74] sm:$0xf] %v776
    %809 = vst [vmem:[%s3 + $0x78] sm:$0xf] %v777
    %810 = vst [vmem:[%s3 + $0x7c] sm:$0xf] %v778
  $region21: #{_gcn_apply.5} parent=0 // pred_fallthru
    _
  // Predicated region
  $region22: #{_gcn_apply.5} parent=0 // pred_check
    _
  $region23: #{_gcn_apply.5} parent=0 // pred_check_branch
    %812 = sbr.rel (0) target = $region25
  $region24: #{_gcn_apply.5} parent=0 // pred_region
    _
  $region25: #{_gcn_apply.5} parent=0 // pred_fallthru
    _
  // Predicated region
  $region26: #{_gcn_apply.5} parent=0 // pred_check
    _
  $region27: #{_gcn_apply.5} parent=0 // pred_check_branch
    %814 = sbr.rel (0) target = $region29
  $region28: #{_gcn_apply.5} parent=0 // pred_region
    _
  $region29: #{_gcn_apply.5} parent=0 // pred_fallthru
    _

</llo_original>
